<compile_context>
chip_gen: v7x
topology: tpu7x:2x2x1
jax: 0.10.0
libtpu: 0.0.40
codegen_flags: <defaults>
</compile_context>

<pallas_src>
import jax
import jax.numpy as jnp
from jax import lax
from jax.experimental import pallas as pl
from jax.experimental.pallas import tpu as pltpu

# ---- config (small, consistent with the module) ----
CONFIG = dict(channels=4, image_size=16, latent_dim=32)
IMG_SHAPE = (CONFIG["channels"], CONFIG["image_size"], CONFIG["image_size"])
IN_DIM = CONFIG["channels"] * CONFIG["image_size"] * CONFIG["image_size"]  # 1024
HIDDEN = 512
LATENT = CONFIG["latent_dim"]
BN_EPS = 1e-5
NEG_SLOPE = 0.2

# Rows of the packed [8, HIDDEN] f32 "vecs" operand.
R_B1, R_SC1, R_B2, R_SC2, R_GAMMA, R_BETA, R_BH = 0, 1, 2, 3, 4, 5, 6


def _leaky_relu(x):
    return jnp.where(x > 0, x, NEG_SLOPE * x)


def encoder_kernel(x_ref, w1_ref, vecs_ref, w2_hbm, wh_hbm, eps_ref,
                   z_ref, w2_buf, wh_buf, sems):
    # Kick off the layer-2 / head weight DMAs so they overlap layer-1 compute.
    w2_cp = pltpu.make_async_copy(w2_hbm, w2_buf, sems.at[0])
    wh_cp = pltpu.make_async_copy(wh_hbm, wh_buf, sems.at[1])
    w2_cp.start()
    wh_cp.start()

    # ---- Layer 1: Linear(IN_DIM -> 512) + LeakyReLU(0.2) ----
    # int8 weights: cast to bf16 (exact for |q| <= 127), MXU bf16 x bf16 -> f32,
    # then dequantize the ACCUMULATOR with the per-output-channel scale row.
    x = x_ref[...].astype(jnp.bfloat16)                              # [B, IN_DIM]
    w1 = w1_ref[...].astype(jnp.bfloat16)                            # [IN_DIM, 512]
    h = jnp.dot(x, w1, preferred_element_type=jnp.float32)
    h = h * vecs_ref[R_SC1:R_SC1 + 1, :] + vecs_ref[R_B1:R_B1 + 1, :]
    h = _leaky_relu(h)                                               # f32 [B, 512]

    # ---- Layer 2: Linear(512 -> 512) ----
    w2_cp.wait()
    w2 = w2_buf[...].astype(jnp.bfloat16)                            # [512, 512]
    h = jnp.dot(h.astype(jnp.bfloat16), w2, preferred_element_type=jnp.float32)
    h = h * vecs_ref[R_SC2:R_SC2 + 1, :] + vecs_ref[R_B2:R_B2 + 1, :]

    # ---- BatchNorm1d(512), training mode (batch stats, biased var), folded ----
    mean = jnp.mean(h, axis=0, keepdims=True)                        # [1, 512]
    var = jnp.maximum(jnp.mean(h * h, axis=0, keepdims=True) - mean * mean, 0.0)
    s = vecs_ref[R_GAMMA:R_GAMMA + 1, :] * lax.rsqrt(var + BN_EPS)   # scale
    t = vecs_ref[R_BETA:R_BETA + 1, :] - mean * s                    # shift
    h = _leaky_relu(h * s + t)

    # ---- Fused heads: [512, 2*LATENT] -> split into mu / logvar ----
    wh_cp.wait()
    head = jnp.dot(h.astype(jnp.bfloat16), wh_buf[...],
                   preferred_element_type=jnp.float32)               # [B, 64]
    head = head + vecs_ref[R_BH:R_BH + 1, :2 * LATENT]
    mu = head[:, :LATENT]
    logvar = head[:, LATENT:]

    # ---- Reparameterization: z = mu + eps * exp(0.5 * logvar) ----
    z_ref[...] = mu + eps_ref[...] * jnp.exp(0.5 * logvar)


def encoder_forward(img, params, eps):
    """img: [B, C, H, W] float32; eps: [B, LATENT] float32 (standard normal)."""
    B = img.shape[0]
    x = img.reshape(B, -1)  # [B, IN_DIM], matches torch flatten of NCHW

    w1_q, w2_q, wh, vecs = params

    vmem = pl.BlockSpec(memory_space=pltpu.MemorySpace.VMEM)
    hbm = pl.BlockSpec(memory_space=pl.ANY)

    flops = 2 * B * (IN_DIM * HIDDEN + HIDDEN * HIDDEN + HIDDEN * 2 * LATENT)
    bytes_accessed = (x.size * 4 + w1_q.size + w2_q.size + wh.size * 2
                      + vecs.size * 4 + eps.size * 4 + B * LATENT * 4)

    z = pl.pallas_call(
        encoder_kernel,
        out_shape=jax.ShapeDtypeStruct((B, LATENT), jnp.float32),
        in_specs=[vmem, vmem, vmem, hbm, hbm, vmem],
        out_specs=vmem,
        scratch_shapes=[
            pltpu.VMEM((HIDDEN, HIDDEN), jnp.int8),        # w2 landing buffer
            pltpu.VMEM((HIDDEN, 2 * LATENT), jnp.bfloat16),  # fused-head buffer
            pltpu.SemaphoreType.DMA((2,)),
        ],
        cost_estimate=pl.CostEstimate(
            flops=flops,
            transcendentals=B * LATENT + HIDDEN,
            bytes_accessed=bytes_accessed),
    )(x, w1_q, vecs, w2_q, wh, eps)
    return z


def _quantize_int8_per_col(w):
    """Symmetric per-output-channel int8 quantization. Returns (int8 w, [1,out] scale)."""
    amax = jnp.max(jnp.abs(w), axis=0, keepdims=True)
    scale = jnp.maximum(amax, 1e-30) / 127.0
    q = jnp.clip(jnp.round(w / scale), -127.0, 127.0).astype(jnp.int8)
    return q, scale


def init_params(key):
    """Deterministic synthetic parameters (shapes match nn.Linear / BatchNorm1d).

    w1/w2 are stored int8 (per-output-channel scales live in the packed `vecs`
    operand); the fused head weight is bf16; all small vectors are packed into a
    single [8, HIDDEN] f32 array to consolidate tiny DMAs.
    """
    ks = jax.random.split(key, 4)

    def lin(k, fan_in, fan_out):
        bound = 1.0 / jnp.sqrt(fan_in)
        kw, kb = jax.random.split(k)
        # stored as [in, out] (transposed vs PyTorch's [out, in]) so kernel does x @ W
        w = jax.random.uniform(kw, (fan_in, fan_out), jnp.float32, -bound, bound)
        b = jax.random.uniform(kb, (1, fan_out), jnp.float32, -bound, bound)
        return w, b

    w1, b1 = lin(ks[0], IN_DIM, HIDDEN)
    w2, b2 = lin(ks[1], HIDDEN, HIDDEN)
    gamma = jnp.ones((1, HIDDEN), jnp.float32)      # BatchNorm1d weight
    beta = jnp.zeros((1, HIDDEN), jnp.float32)      # BatchNorm1d bias
    wmu, bmu = lin(ks[2], HIDDEN, LATENT)
    wlv, blv = lin(ks[3], HIDDEN, LATENT)

    # Fuse the two heads into one [512, 2*LATENT] weight / [1, 2*LATENT] bias.
    wh = jnp.concatenate([wmu, wlv], axis=1)
    bh = jnp.concatenate([bmu, blv], axis=1)

    w1_q, s1 = _quantize_int8_per_col(w1)
    w2_q, s2 = _quantize_int8_per_col(w2)

    bh_pad = jnp.zeros((1, HIDDEN), jnp.float32).at[:, :2 * LATENT].set(bh)
    vecs = jnp.concatenate(
        [b1, s1, b2, s2, gamma, beta, bh_pad, jnp.zeros((1, HIDDEN), jnp.float32)],
        axis=0)  # [8, HIDDEN] f32  (rows: b1, scale1, b2, scale2, gamma, beta, bh, pad)

    return w1_q, w2_q, wh.astype(jnp.bfloat16), vecs


if __name__ == "__main__":
    key = jax.random.PRNGKey(0)
    k_img, k_eps, k_params = jax.random.split(key, 3)

    B = 16  # fills bf16 (16,128) sublane packing at no extra weight DMA
    img = jax.random.normal(k_img, (B, *IMG_SHAPE), jnp.float32)     # [16, 4, 16, 16]
    eps = jax.random.normal(k_eps, (B, LATENT), jnp.float32)         # randn_like(std)
    params = init_params(k_params)

    z = encoder_forward(img, params, eps)
    z = jax.block_until_ready(z)
    assert z.shape == (B, LATENT) and z.dtype == jnp.float32
    assert bool(jnp.all(jnp.isfinite(z)))
    print("KERNEL_OK")
</pallas_src>

<mosaic_0001>
module attributes {stable_mosaic.version = 11 : i64} {
  func.func @encoder_kernel(%arg0: memref<16x1024xf32, #tpu.memory_space<vmem>>, %arg1: memref<1024x512xi8, #tpu.memory_space<vmem>>, %arg2: memref<8x512xf32, #tpu.memory_space<vmem>>, %arg3: memref<512x512xi8, #tpu.memory_space<any>>, %arg4: memref<512x64xbf16, #tpu.memory_space<any>>, %arg5: memref<16x32xf32, #tpu.memory_space<vmem>>, %arg6: memref<16x32xf32, #tpu.memory_space<vmem>>, %arg7: memref<512x512xi8, #tpu.memory_space<vmem>>, %arg8: memref<512x64xbf16, #tpu.memory_space<vmem>>, %arg9: memref<2x!tpu.dma_semaphore, #tpu.memory_space<semaphore_mem>>) attributes {dimension_semantics = [], scalar_prefetch = 0 : i64, scratch_operands = 3 : i64, tpu.core_type = #tpu.core_type<tc>} {
    %c0_i32 = arith.constant 0 : i32
    %0 = tpu.memref_slice %arg9[%c0_i32] : memref<2x!tpu.dma_semaphore, #tpu.memory_space<semaphore_mem>> -> memref<1x!tpu.dma_semaphore, #tpu.memory_space<semaphore_mem>>
    %1 = tpu.memref_squeeze %0 : memref<1x!tpu.dma_semaphore, #tpu.memory_space<semaphore_mem>> -> memref<!tpu.dma_semaphore, #tpu.memory_space<semaphore_mem>>
    tpu.enqueue_dma source(%arg3 : memref<512x512xi8, #tpu.memory_space<any>>) target(%arg7 : memref<512x512xi8, #tpu.memory_space<vmem>>) target_semaphore(%1 : memref<!tpu.dma_semaphore, #tpu.memory_space<semaphore_mem>>)
    %c1_i32 = arith.constant 1 : i32
    %2 = tpu.memref_slice %arg9[%c1_i32] : memref<2x!tpu.dma_semaphore, #tpu.memory_space<semaphore_mem>> -> memref<1x!tpu.dma_semaphore, #tpu.memory_space<semaphore_mem>>
    %3 = tpu.memref_squeeze %2 : memref<1x!tpu.dma_semaphore, #tpu.memory_space<semaphore_mem>> -> memref<!tpu.dma_semaphore, #tpu.memory_space<semaphore_mem>>
    tpu.enqueue_dma source(%arg4 : memref<512x64xbf16, #tpu.memory_space<any>>) target(%arg8 : memref<512x64xbf16, #tpu.memory_space<vmem>>) target_semaphore(%3 : memref<!tpu.dma_semaphore, #tpu.memory_space<semaphore_mem>>)
    %c0 = arith.constant 0 : index
    %c0_0 = arith.constant 0 : index
    %4 = vector.load %arg0[%c0, %c0_0] : memref<16x1024xf32, #tpu.memory_space<vmem>>, vector<16x1024xf32>
    %5 = arith.truncf %4 : vector<16x1024xf32> to vector<16x1024xbf16>
    %c0_1 = arith.constant 0 : index
    %c0_2 = arith.constant 0 : index
    %6 = vector.load %arg1[%c0_1, %c0_2] : memref<1024x512xi8, #tpu.memory_space<vmem>>, vector<1024x512xi8>
    %7 = arith.sitofp %6 : vector<1024x512xi8> to vector<1024x512xbf16>
    %cst = arith.constant dense<0.000000e+00> : vector<16x512xf32>
    %8 = tpu.matmul %5, %7, %cst {dimension_numbers = #tpu.dot_dimension_numbers<[1], [0], [0], [1], [0, 0, 1, 1], [], []>} : vector<16x1024xbf16>, vector<1024x512xbf16>, vector<16x512xf32> -> vector<16x512xf32>
    %c1 = arith.constant 1 : index
    %c0_3 = arith.constant 0 : index
    %9 = vector.load %arg2[%c1, %c0_3] : memref<8x512xf32, #tpu.memory_space<vmem>>, vector<1x512xf32>
    %10 = vector.broadcast %9 : vector<1x512xf32> to vector<16x512xf32>
    %11 = arith.mulf %8, %10 : vector<16x512xf32>
    %c0_4 = arith.constant 0 : index
    %c0_5 = arith.constant 0 : index
    %12 = vector.load %arg2[%c0_4, %c0_5] : memref<8x512xf32, #tpu.memory_space<vmem>>, vector<1x512xf32>
    %13 = vector.broadcast %12 : vector<1x512xf32> to vector<16x512xf32>
    %14 = arith.addf %11, %13 : vector<16x512xf32>
    %cst_6 = arith.constant 0.000000e+00 : f32
    %15 = vector.broadcast %cst_6 : f32 to vector<16x512xf32>
    %16 = arith.cmpf ogt, %14, %15 : vector<16x512xf32>
    %cst_7 = arith.constant 2.000000e-01 : f32
    %17 = vector.broadcast %cst_7 : f32 to vector<16x512xf32>
    %18 = arith.mulf %17, %14 : vector<16x512xf32>
    %19 = arith.select %16, %14, %18 : vector<16x512xi1>, vector<16x512xf32>
    %c0_i32_8 = arith.constant 0 : i32
    %20 = tpu.memref_slice %arg9[%c0_i32_8] : memref<2x!tpu.dma_semaphore, #tpu.memory_space<semaphore_mem>> -> memref<1x!tpu.dma_semaphore, #tpu.memory_space<semaphore_mem>>
    %21 = tpu.memref_squeeze %20 : memref<1x!tpu.dma_semaphore, #tpu.memory_space<semaphore_mem>> -> memref<!tpu.dma_semaphore, #tpu.memory_space<semaphore_mem>>
    tpu.wait_dma2 semaphore(%21 : memref<!tpu.dma_semaphore, #tpu.memory_space<semaphore_mem>>) src(%arg3 : memref<512x512xi8, #tpu.memory_space<any>>) dst(%arg7 : memref<512x512xi8, #tpu.memory_space<vmem>>)
    %c0_9 = arith.constant 0 : index
    %c0_10 = arith.constant 0 : index
    %22 = vector.load %arg7[%c0_9, %c0_10] : memref<512x512xi8, #tpu.memory_space<vmem>>, vector<512x512xi8>
    %23 = arith.sitofp %22 : vector<512x512xi8> to vector<512x512xbf16>
    %24 = arith.truncf %19 : vector<16x512xf32> to vector<16x512xbf16>
    %cst_11 = arith.constant dense<0.000000e+00> : vector<16x512xf32>
    %25 = tpu.matmul %24, %23, %cst_11 {dimension_numbers = #tpu.dot_dimension_numbers<[1], [0], [0], [1], [0, 0, 1, 1], [], []>} : vector<16x512xbf16>, vector<512x512xbf16>, vector<16x512xf32> -> vector<16x512xf32>
    %c3 = arith.constant 3 : index
    %c0_12 = arith.constant 0 : index
    %26 = vector.load %arg2[%c3, %c0_12] : memref<8x512xf32, #tpu.memory_space<vmem>>, vector<1x512xf32>
    %27 = vector.broadcast %26 : vector<1x512xf32> to vector<16x512xf32>
    %28 = arith.mulf %25, %27 : vector<16x512xf32>
    %c2 = arith.constant 2 : index
    %c0_13 = arith.constant 0 : index
    %29 = vector.load %arg2[%c2, %c0_13] : memref<8x512xf32, #tpu.memory_space<vmem>>, vector<1x512xf32>
    %30 = vector.broadcast %29 : vector<1x512xf32> to vector<16x512xf32>
    %31 = arith.addf %28, %30 : vector<16x512xf32>
    %cst_14 = arith.constant dense<0.000000e+00> : vector<512xf32>
    %32 = vector.multi_reduction <add>, %31, %cst_14 [0] : vector<16x512xf32> to vector<512xf32>
    %33 = vector.shape_cast %32 : vector<512xf32> to vector<1x512xf32>
    %cst_15 = arith.constant 1.600000e+01 : f32
    %34 = vector.broadcast %cst_15 : f32 to vector<1x512xf32>
    %35 = arith.divf %33, %34 : vector<1x512xf32>
    %36 = arith.mulf %31, %31 : vector<16x512xf32>
    %cst_16 = arith.constant dense<0.000000e+00> : vector<512xf32>
    %37 = vector.multi_reduction <add>, %36, %cst_16 [0] : vector<16x512xf32> to vector<512xf32>
    %38 = vector.shape_cast %37 : vector<512xf32> to vector<1x512xf32>
    %cst_17 = arith.constant 1.600000e+01 : f32
    %39 = vector.broadcast %cst_17 : f32 to vector<1x512xf32>
    %40 = arith.divf %38, %39 : vector<1x512xf32>
    %41 = arith.mulf %35, %35 : vector<1x512xf32>
    %42 = arith.subf %40, %41 : vector<1x512xf32>
    %cst_18 = arith.constant 0.000000e+00 : f32
    %43 = vector.broadcast %cst_18 : f32 to vector<1x512xf32>
    %44 = arith.maximumf %42, %43 : vector<1x512xf32>
    %c4 = arith.constant 4 : index
    %c0_19 = arith.constant 0 : index
    %45 = vector.load %arg2[%c4, %c0_19] : memref<8x512xf32, #tpu.memory_space<vmem>>, vector<1x512xf32>
    %cst_20 = arith.constant 9.99999974E-6 : f32
    %46 = vector.broadcast %cst_20 : f32 to vector<1x512xf32>
    %47 = arith.addf %44, %46 : vector<1x512xf32>
    %48 = math.rsqrt %47 : vector<1x512xf32>
    %49 = arith.mulf %45, %48 : vector<1x512xf32>
    %c5 = arith.constant 5 : index
    %c0_21 = arith.constant 0 : index
    %50 = vector.load %arg2[%c5, %c0_21] : memref<8x512xf32, #tpu.memory_space<vmem>>, vector<1x512xf32>
    %51 = arith.mulf %35, %49 : vector<1x512xf32>
    %52 = arith.subf %50, %51 : vector<1x512xf32>
    %53 = vector.broadcast %49 : vector<1x512xf32> to vector<16x512xf32>
    %54 = arith.mulf %31, %53 : vector<16x512xf32>
    %55 = vector.broadcast %52 : vector<1x512xf32> to vector<16x512xf32>
    %56 = arith.addf %54, %55 : vector<16x512xf32>
    %cst_22 = arith.constant 0.000000e+00 : f32
    %57 = vector.broadcast %cst_22 : f32 to vector<16x512xf32>
    %58 = arith.cmpf ogt, %56, %57 : vector<16x512xf32>
    %cst_23 = arith.constant 2.000000e-01 : f32
    %59 = vector.broadcast %cst_23 : f32 to vector<16x512xf32>
    %60 = arith.mulf %59, %56 : vector<16x512xf32>
    %61 = arith.select %58, %56, %60 : vector<16x512xi1>, vector<16x512xf32>
    %c1_i32_24 = arith.constant 1 : i32
    %62 = tpu.memref_slice %arg9[%c1_i32_24] : memref<2x!tpu.dma_semaphore, #tpu.memory_space<semaphore_mem>> -> memref<1x!tpu.dma_semaphore, #tpu.memory_space<semaphore_mem>>
    %63 = tpu.memref_squeeze %62 : memref<1x!tpu.dma_semaphore, #tpu.memory_space<semaphore_mem>> -> memref<!tpu.dma_semaphore, #tpu.memory_space<semaphore_mem>>
    tpu.wait_dma2 semaphore(%63 : memref<!tpu.dma_semaphore, #tpu.memory_space<semaphore_mem>>) src(%arg4 : memref<512x64xbf16, #tpu.memory_space<any>>) dst(%arg8 : memref<512x64xbf16, #tpu.memory_space<vmem>>)
    %64 = arith.truncf %61 : vector<16x512xf32> to vector<16x512xbf16>
    %c0_25 = arith.constant 0 : index
    %c0_26 = arith.constant 0 : index
    %65 = vector.load %arg8[%c0_25, %c0_26] : memref<512x64xbf16, #tpu.memory_space<vmem>>, vector<512x64xbf16>
    %cst_27 = arith.constant dense<0.000000e+00> : vector<16x64xf32>
    %66 = tpu.matmul %64, %65, %cst_27 {dimension_numbers = #tpu.dot_dimension_numbers<[1], [0], [0], [1], [0, 0, 1, 1], [], []>} : vector<16x512xbf16>, vector<512x64xbf16>, vector<16x64xf32> -> vector<16x64xf32>
    %c6 = arith.constant 6 : index
    %c0_28 = arith.constant 0 : index
    %67 = vector.load %arg2[%c6, %c0_28] : memref<8x512xf32, #tpu.memory_space<vmem>>, vector<1x64xf32>
    %68 = vector.broadcast %67 : vector<1x64xf32> to vector<16x64xf32>
    %69 = arith.addf %66, %68 : vector<16x64xf32>
    %70 = vector.extract_strided_slice %69 {offsets = [0, 0], sizes = [16, 32], strides = [1, 1]} : vector<16x64xf32> to vector<16x32xf32>
    %71 = vector.extract_strided_slice %69 {offsets = [0, 32], sizes = [16, 32], strides = [1, 1]} : vector<16x64xf32> to vector<16x32xf32>
    %c0_29 = arith.constant 0 : index
    %c0_30 = arith.constant 0 : index
    %72 = vector.load %arg5[%c0_29, %c0_30] : memref<16x32xf32, #tpu.memory_space<vmem>>, vector<16x32xf32>
    %cst_31 = arith.constant 5.000000e-01 : f32
    %73 = vector.broadcast %cst_31 : f32 to vector<16x32xf32>
    %74 = arith.mulf %73, %71 : vector<16x32xf32>
    %75 = math.exp %74 : vector<16x32xf32>
    %76 = arith.mulf %72, %75 : vector<16x32xf32>
    %77 = arith.addf %70, %76 : vector<16x32xf32>
    %c0_32 = arith.constant 0 : index
    %c0_33 = arith.constant 0 : index
    %78 = vector.load %arg6[%c0_32, %c0_33] : memref<16x32xf32, #tpu.memory_space<vmem>>, vector<16x32xf32>
    tpu.vector_store %arg6[%c0_32, %c0_33], %77 {strides = array<i32>} : memref<16x32xf32, #tpu.memory_space<vmem>>, vector<16x32xf32>,
    return
  }
}

</mosaic_0001>

<llo_original>
// kernel: tpu_custom_call.1
$region0: #{tpu_custom_call.1}
  #allocation0 [shape = 'u32[]', space=smem, size = 0x4, offset = 0x4, fixed_abs, tag = 'smem constant byte address 0x4 - core index']
  #allocation1 [shape = 'u32[144,128]{1,0:T(1,128)}', space=vmem, size = 0x12000, scoped, tag = 'internal scratch']
  #allocation2 [shape = 's8[512,512]{1,0:T(32,128)(4,1)}', space=vmem, size = 0x40000, scoped, tag = 'scratch operand']
  #allocation3 [shape = 'bf16[512,64]{1,0:T(16,128)(2,1)}', space=vmem, size = 0x20000, scoped, tag = 'scratch operand']
  #allocation4 [shape = 's32[2]{0}', space=sflag, size = 0x8, scoped, tag = 'scratch operand']
  #allocation9 [shape = 's32[]', space=sflag, size = 0x4, offset = 0, fixed_abs, tag = 'sflag constant byte address 0x0 - dummy sync flag']
  #allocation10 [shape = 's32[]', space=sflag, size = 0x4, offset = 0, fixed_abs, tag = 'sflag constant byte address 0x0 - dummy sync flag']
  #allocation11 [shape = 'u32[]', space=smem, size = 0x4, offset = 0x44, fixed_abs, tag = 'smem constant byte address 0x44 - assertion arg 0']
  #allocation12 [shape = 'u32[]', space=smem, size = 0x4, offset = 0x48, fixed_abs, tag = 'smem constant byte address 0x48 - assertion arg 1']
  #allocation13 [shape = 's32[]', space=sflag, size = 0x4, offset = 0, fixed_abs, tag = 'sflag constant byte address 0x0 - dummy sync flag']
  %s0 = inlined_call_operand.vmem [shape: f32[16,1024], index: 0, kind: input, shape index: {}]
  %s1 = inlined_call_operand.hbm [shape: s8[1024,512], index: 1, kind: input, shape index: {}]
  %s2 = inlined_call_operand.vmem [shape: f32[8,512], index: 2, kind: input, shape index: {}]
  %s3 = inlined_call_operand.hbm [shape: s8[512,512], index: 3, kind: input, shape index: {}]
  %s4 = inlined_call_operand.vmem [shape: bf16[512,64], index: 4, kind: input, shape index: {}]
  %s5 = inlined_call_operand.vmem [shape: f32[16,32], index: 5, kind: input, shape index: {}]
  %s6 = inlined_call_operand.hbm [shape: f32[16,32], index: 6, kind: output, shape index: {}]
  %s7 = sld [smem:[#allocation0]]
  $region68: #{tpu_custom_call.1} parent=0
    _
  %s9 = ssub.s32 1, %s7
  %s10 = scalar_select 0, %s9, %s7
  $region1: #{tpu_custom_call.1} parent=0
    #allocation5 [shape = 'u8[524288]{0}', space=vmem, size = 0x80000, scoped, tag = 'input window, operand 1, single buffered']
    #allocation6 [shape = 's32[1]{0}', space=sflag, size = 0x4, scoped, tag = 'scoped memory for tpu_custom_call.1']
    #allocation7 [shape = 's32[1]{0}', space=sflag, size = 0x4, scoped, tag = 'scoped memory for tpu_custom_call.1']
    #allocation8 [shape = 'u8[8192]{0}', space=vmem, size = 0x2000, scoped, tag = 'output window, operand 0, single buffered']
    %11 = vsyncpa [#allocation6], 0
    %12 = vsyncpa [#allocation7], 0
    // Predicated region
    $region2: #{tpu_custom_call.1} parent=1 // pred_check
      _
    $region3: #{tpu_custom_call.1} parent=1 // pred_check_branch
      %14 = sbr.rel (0) target = $region5
    $region4: #{tpu_custom_call.1} parent=1 // pred_region
      _
    $region5: #{tpu_custom_call.1} parent=1 // pred_fallthru
      _
    // Predicated region
    $region6: #{tpu_custom_call.1} parent=1 // pred_check
      _
    $region7: #{tpu_custom_call.1} parent=1 // pred_check_branch
      %16 = sbr.rel (0) target = $region9
    $region8: #{tpu_custom_call.1} parent=1 // pred_region
      %s18 = ssub.s32 16384, 16384
      %19 = vsyncadd [#allocation6], %s18
      %s20 = sshll.u32 [#allocation5], 4
      %s21 = int_to_ptr.vmem [resolvable:$true] %s20
      %26 = dma.hbm_to_vmem [thread:$0]  %s1, 16384, %s21, [#allocation6], 512, 512, 32
    $region9: #{tpu_custom_call.1} parent=1 // pred_fallthru
      _
    // Predicated region
    $region10: #{tpu_custom_call.1} parent=1 // pred_check
      _
    $region11: #{tpu_custom_call.1} parent=1 // pred_check_branch
      %28 = sbr.rel (0) target = $region13
    $region12: #{tpu_custom_call.1} parent=1 // pred_region
      _
    $region13: #{tpu_custom_call.1} parent=1 // pred_fallthru
      _
    // Predicated region
    $region14: #{tpu_custom_call.1} parent=1 // pred_check
      _
    $region15: #{tpu_custom_call.1} parent=1 // pred_check_branch
      %30 = sbr.rel (0) target = $region17
    $region16: #{tpu_custom_call.1} parent=1 // pred_region
      _
    $region17: #{tpu_custom_call.1} parent=1 // pred_fallthru
      _
    // Predicated region
    $region18: #{tpu_custom_call.1} parent=1 // pred_check
      _
    $region19: #{tpu_custom_call.1} parent=1 // pred_check_branch
      %32 = sbr.rel (0) target = $region21
    $region20: #{tpu_custom_call.1} parent=1 // pred_region
      %33 = dma.done [#allocation6], 16384
    $region21: #{tpu_custom_call.1} parent=1 // pred_fallthru
      _
    // Predicated region
    $region22: #{tpu_custom_call.1} parent=1 // pred_check
      _
    $region23: #{tpu_custom_call.1} parent=1 // pred_check_branch
      %36 = sbr.rel target = $region25
    $region24: #{tpu_custom_call.1} parent=1 // pred_region
      %37 = sst [smem:[#allocation11]] [#allocation10]
      %38 = sst [smem:[#allocation12]] [#allocation9]
    $region25: #{tpu_custom_call.1} parent=1 // pred_fallthru
      _
    %40 = shalt.err (0)
    %s42 = sshll.u32 [#allocation2], 4
    %s43 = int_to_ptr.vmem [resolvable:$true] %s42
    %45 = dma.hbm_to_vmem [thread:$0]  %s3, 8192, %s43, [#allocation4]
    %s46 = scalar_lea.sflag [#allocation4], 1
    %p48 = scmp.lt.u32.totalorder 256, 8
    %p49 = pneg %p48
    // Predicated region
    $region26: #{tpu_custom_call.1} parent=1 // pred_check
      _
    $region27: #{tpu_custom_call.1} parent=1 // pred_check_branch
      %51 = sbr.rel (%p48) target = $region29
    $region28: #{tpu_custom_call.1} parent=1 // pred_region
      %s66 = sand.u32 256, 7
      %p67 = scmp.eq.s32.totalorder %s66, 0
      // Predicated region
      $region41: #{tpu_custom_call.1} parent=28 // pred_check
        %p68 = pneg %p67
      $region42: #{tpu_custom_call.1} parent=28 // pred_check_branch
        %70 = sbr.rel (%p68) target = $region44
      $region43: #{tpu_custom_call.1} parent=28 // pred_region
        loop: start=0, step=1, limit=1
        $region45: #{tpu_custom_call.1} parent=43 // loop_pre_header
          _
        $region46: #{tpu_custom_call.1} parent=43 // loop_header
          %s72 = sphi 0, %s76
          %p73 = scmp.ge.s32.totalorder %s72, 1
          %s77 = sphi %s4, %s4
          %s78 = sphi [#allocation3], [#allocation3]
        $region47: #{tpu_custom_call.1} parent=43 // loop_header_branch
          %75 = sbr.rel (%p73) target = $region51
        $region48: #{tpu_custom_call.1} parent=43 // loop_body
          %v79 = vld [vmem:[%s77] sm:$0xff]
          %80 = vst [vmem:[%s78] sm:$0xff] %v79
          %v81 = vld [vmem:[%s77 + $0x8] sm:$0xff]
          %82 = vst [vmem:[%s78 + $0x8] sm:$0xff] %v81
          %v83 = vld [vmem:[%s77 + $0x10] sm:$0xff]
          %84 = vst [vmem:[%s78 + $0x10] sm:$0xff] %v83
          %v85 = vld [vmem:[%s77 + $0x18] sm:$0xff]
          %86 = vst [vmem:[%s78 + $0x18] sm:$0xff] %v85
          %v87 = vld [vmem:[%s77 + $0x20] sm:$0xff]
          %88 = vst [vmem:[%s78 + $0x20] sm:$0xff] %v87
          %v89 = vld [vmem:[%s77 + $0x28] sm:$0xff]
          %90 = vst [vmem:[%s78 + $0x28] sm:$0xff] %v89
          %v91 = vld [vmem:[%s77 + $0x30] sm:$0xff]
          %92 = vst [vmem:[%s78 + $0x30] sm:$0xff] %v91
          %v93 = vld [vmem:[%s77 + $0x38] sm:$0xff]
          %94 = vst [vmem:[%s78 + $0x38] sm:$0xff] %v93
          %v95 = vld [vmem:[%s77 + $0x40] sm:$0xff]
          %96 = vst [vmem:[%s78 + $0x40] sm:$0xff] %v95
          %v97 = vld [vmem:[%s77 + $0x48] sm:$0xff]
          %98 = vst [vmem:[%s78 + $0x48] sm:$0xff] %v97
          %v99 = vld [vmem:[%s77 + $0x50] sm:$0xff]
          %100 = vst [vmem:[%s78 + $0x50] sm:$0xff] %v99
          %v101 = vld [vmem:[%s77 + $0x58] sm:$0xff]
          %102 = vst [vmem:[%s78 + $0x58] sm:$0xff] %v101
          %v103 = vld [vmem:[%s77 + $0x60] sm:$0xff]
          %104 = vst [vmem:[%s78 + $0x60] sm:$0xff] %v103
          %v105 = vld [vmem:[%s77 + $0x68] sm:$0xff]
          %106 = vst [vmem:[%s78 + $0x68] sm:$0xff] %v105
          %v107 = vld [vmem:[%s77 + $0x70] sm:$0xff]
          %108 = vst [vmem:[%s78 + $0x70] sm:$0xff] %v107
          %v109 = vld [vmem:[%s77 + $0x78] sm:$0xff]
          %110 = vst [vmem:[%s78 + $0x78] sm:$0xff] %v109
          %v111 = vld [vmem:[%s77 + $0x80] sm:$0xff]
          %112 = vst [vmem:[%s78 + $0x80] sm:$0xff] %v111
          %v113 = vld [vmem:[%s77 + $0x88] sm:$0xff]
          %114 = vst [vmem:[%s78 + $0x88] sm:$0xff] %v113
          %v115 = vld [vmem:[%s77 + $0x90] sm:$0xff]
          %116 = vst [vmem:[%s78 + $0x90] sm:$0xff] %v115
          %v117 = vld [vmem:[%s77 + $0x98] sm:$0xff]
          %118 = vst [vmem:[%s78 + $0x98] sm:$0xff] %v117
          %v119 = vld [vmem:[%s77 + $0xa0] sm:$0xff]
          %120 = vst [vmem:[%s78 + $0xa0] sm:$0xff] %v119
          %v121 = vld [vmem:[%s77 + $0xa8] sm:$0xff]
          %122 = vst [vmem:[%s78 + $0xa8] sm:$0xff] %v121
          %v123 = vld [vmem:[%s77 + $0xb0] sm:$0xff]
          %124 = vst [vmem:[%s78 + $0xb0] sm:$0xff] %v123
          %v125 = vld [vmem:[%s77 + $0xb8] sm:$0xff]
          %126 = vst [vmem:[%s78 + $0xb8] sm:$0xff] %v125
          %v127 = vld [vmem:[%s77 + $0xc0] sm:$0xff]
          %128 = vst [vmem:[%s78 + $0xc0] sm:$0xff] %v127
          %v129 = vld [vmem:[%s77 + $0xc8] sm:$0xff]
          %130 = vst [vmem:[%s78 + $0xc8] sm:$0xff] %v129
          %v131 = vld [vmem:[%s77 + $0xd0] sm:$0xff]
          %132 = vst [vmem:[%s78 + $0xd0] sm:$0xff] %v131
          %v133 = vld [vmem:[%s77 + $0xd8] sm:$0xff]
          %134 = vst [vmem:[%s78 + $0xd8] sm:$0xff] %v133
          %v135 = vld [vmem:[%s77 + $0xe0] sm:$0xff]
          %136 = vst [vmem:[%s78 + $0xe0] sm:$0xff] %v135
          %v137 = vld [vmem:[%s77 + $0xe8] sm:$0xff]
          %138 = vst [vmem:[%s78 + $0xe8] sm:$0xff] %v137
          %v139 = vld [vmem:[%s77 + $0xf0] sm:$0xff]
          %140 = vst [vmem:[%s78 + $0xf0] sm:$0xff] %v139
          %v141 = vld [vmem:[%s77 + $0xf8] sm:$0xff]
          %142 = vst [vmem:[%s78 + $0xf8] sm:$0xff] %v141
        $region49: #{tpu_custom_call.1} parent=43 // loop_footer
          %s76 = sadd.s32 1, %s72
        $region50: #{tpu_custom_call.1} parent=43 // loop_footer_branch
          %71 = sbr.rel target = $region46
        $region51: #{tpu_custom_call.1} parent=43 // loop_exit
          _
      $region44: #{tpu_custom_call.1} parent=28 // pred_fallthru
        _
      %p143 = pneg %p67
      // Predicated region
      $region52: #{tpu_custom_call.1} parent=28 // pred_check
        _
      $region53: #{tpu_custom_call.1} parent=28 // pred_check_branch
        %145 = sbr.rel (%p67) target = $region55
      $region54: #{tpu_custom_call.1} parent=28 // pred_region
        %s146 = sand.u32 256, 7
      $region55: #{tpu_custom_call.1} parent=28 // pred_fallthru
        _
    $region29: #{tpu_custom_call.1} parent=1 // pred_fallthru
      _
    // Predicated region
    $region30: #{tpu_custom_call.1} parent=1 // pred_check
      %p52 = pneg %p48
    $region31: #{tpu_custom_call.1} parent=1 // pred_check_branch
      %54 = sbr.rel (%p52) target = $region33
    $region32: #{tpu_custom_call.1} parent=1 // pred_region
      %s55 = sshllo.u32 0, 256
      loop: start=0, step=1, limit=1
      $region34: #{tpu_custom_call.1} parent=32 // loop_pre_header
        _
      $region35: #{tpu_custom_call.1} parent=32 // loop_header
        %s57 = sphi 0, %s61
        %p58 = scmp.ge.s32.totalorder %s57, 1
        %s62 = sphi %s4, %s4
        %s63 = sphi [#allocation3], [#allocation3]
      $region36: #{tpu_custom_call.1} parent=32 // loop_header_branch
        %60 = sbr.rel (%p58) target = $region40
      $region37: #{tpu_custom_call.1} parent=32 // loop_body
        %v64 = vld [vmem:[%s62] sm:%s55]
        %65 = vst [vmem:[%s63] sm:%s55] %v64
      $region38: #{tpu_custom_call.1} parent=32 // loop_footer
        %s61 = sadd.s32 1, %s57
      $region39: #{tpu_custom_call.1} parent=32 // loop_footer_branch
        %56 = sbr.rel target = $region35
      $region40: #{tpu_custom_call.1} parent=32 // loop_exit
        _
    $region33: #{tpu_custom_call.1} parent=1 // pred_fallthru
      _
    // Predicated region
    $region56: #{tpu_custom_call.1} parent=1 // pred_check
      _
    $region57: #{tpu_custom_call.1} parent=1 // pred_check_branch
      %149 = sbr.rel (0) target = $region59
    $region58: #{tpu_custom_call.1} parent=1 // pred_region
      %150 = vsyncadd %s46, 4096
    $region59: #{tpu_custom_call.1} parent=1 // pred_fallthru
      _
    %v151 = vld [vmem:[%s0] sm:$0xff]
    %v152 = vld [vmem:[%s0 + $0x8] sm:$0xff]
    %v153 = vld [vmem:[%s0 + $0x10] sm:$0xff]
    %v154 = vld [vmem:[%s0 + $0x18] sm:$0xff]
    %v155 = vld [vmem:[%s0 + $0x20] sm:$0xff]
    %v156 = vld [vmem:[%s0 + $0x28] sm:$0xff]
    %v157 = vld [vmem:[%s0 + $0x30] sm:$0xff]
    %v158 = vld [vmem:[%s0 + $0x38] sm:$0xff]
    %v159 = vld [vmem:[%s0 + $0x40] sm:$0xff]
    %v160 = vld [vmem:[%s0 + $0x48] sm:$0xff]
    %v161 = vld [vmem:[%s0 + $0x50] sm:$0xff]
    %v162 = vld [vmem:[%s0 + $0x58] sm:$0xff]
    %v163 = vld [vmem:[%s0 + $0x60] sm:$0xff]
    %v164 = vld [vmem:[%s0 + $0x68] sm:$0xff]
    %v165 = vld [vmem:[%s0 + $0x70] sm:$0xff]
    %v166 = vld [vmem:[%s0 + $0x78] sm:$0xff]
    %v167 = vpack.c.bf16 %v159, %v151
    %v168 = vpack.c.bf16 %v160, %v152
    %v169 = vpack.c.bf16 %v161, %v153
    %v170 = vpack.c.bf16 %v162, %v154
    %v171 = vpack.c.bf16 %v163, %v155
    %v172 = vpack.c.bf16 %v164, %v156
    %v173 = vpack.c.bf16 %v165, %v157
    %v174 = vpack.c.bf16 %v166, %v158
    %v175 = vld [vmem:[#allocation5] sm:$0xff]
    %v176 = vld [vmem:[#allocation5 + $0x8] sm:$0xff]
    %v177 = vld [vmem:[#allocation5 + $0x10] sm:$0xff]
    %v178 = vld [vmem:[#allocation5 + $0x18] sm:$0xff]
    %v179 = vld [vmem:[#allocation5 + $0x20] sm:$0xff]
    %v180 = vld [vmem:[#allocation5 + $0x28] sm:$0xff]
    %v181 = vld [vmem:[#allocation5 + $0x30] sm:$0xff]
    %v182 = vld [vmem:[#allocation5 + $0x38] sm:$0xff]
    %v183 = vld [vmem:[#allocation5 + $0x40] sm:$0xff]
    %v184 = vld [vmem:[#allocation5 + $0x48] sm:$0xff]
    %v185 = vld [vmem:[#allocation5 + $0x50] sm:$0xff]
    %v186 = vld [vmem:[#allocation5 + $0x58] sm:$0xff]
    %v187 = vld [vmem:[#allocation5 + $0x60] sm:$0xff]
    %v188 = vld [vmem:[#allocation5 + $0x68] sm:$0xff]
    %v189 = vld [vmem:[#allocation5 + $0x70] sm:$0xff]
    %v190 = vld [vmem:[#allocation5 + $0x78] sm:$0xff]
    %v191 = vld [vmem:[#allocation5 + $0x80] sm:$0xff]
    %v192 = vld [vmem:[#allocation5 + $0x88] sm:$0xff]
    %v193 = vld [vmem:[#allocation5 + $0x90] sm:$0xff]
    %v194 = vld [vmem:[#allocation5 + $0x98] sm:$0xff]
    %v195 = vld [vmem:[#allocation5 + $0xa0] sm:$0xff]
    %v196 = vld [vmem:[#allocation5 + $0xa8] sm:$0xff]
    %v197 = vld [vmem:[#allocation5 + $0xb0] sm:$0xff]
    %v198 = vld [vmem:[#allocation5 + $0xb8] sm:$0xff]
    %v199 = vld [vmem:[#allocation5 + $0xc0] sm:$0xff]
    %v200 = vld [vmem:[#allocation5 + $0xc8] sm:$0xff]
    %v201 = vld [vmem:[#allocation5 + $0xd0] sm:$0xff]
    %v202 = vld [vmem:[#allocation5 + $0xd8] sm:$0xff]
    %v203 = vld [vmem:[#allocation5 + $0xe0] sm:$0xff]
    %v204 = vld [vmem:[#allocation5 + $0xe8] sm:$0xff]
    %v205 = vld [vmem:[#allocation5 + $0xf0] sm:$0xff]
    %v206 = vld [vmem:[#allocation5 + $0xf8] sm:$0xff]
    %v207 = vld [vmem:[#allocation5 + $0x100] sm:$0xff]
    %v208 = vld [vmem:[#allocation5 + $0x108] sm:$0xff]
    %v209 = vld [vmem:[#allocation5 + $0x110] sm:$0xff]
    %v210 = vld [vmem:[#allocation5 + $0x118] sm:$0xff]
    %v211 = vld [vmem:[#allocation5 + $0x120] sm:$0xff]
    %v212 = vld [vmem:[#allocation5 + $0x128] sm:$0xff]
    %v213 = vld [vmem:[#allocation5 + $0x130] sm:$0xff]
    %v214 = vld [vmem:[#allocation5 + $0x138] sm:$0xff]
    %v215 = vld [vmem:[#allocation5 + $0x140] sm:$0xff]
    %v216 = vld [vmem:[#allocation5 + $0x148] sm:$0xff]
    %v217 = vld [vmem:[#allocation5 + $0x150] sm:$0xff]
    %v218 = vld [vmem:[#allocation5 + $0x158] sm:$0xff]
    %v219 = vld [vmem:[#allocation5 + $0x160] sm:$0xff]
    %v220 = vld [vmem:[#allocation5 + $0x168] sm:$0xff]
    %v221 = vld [vmem:[#allocation5 + $0x170] sm:$0xff]
    %v222 = vld [vmem:[#allocation5 + $0x178] sm:$0xff]
    %v223 = vld [vmem:[#allocation5 + $0x180] sm:$0xff]
    %v224 = vld [vmem:[#allocation5 + $0x188] sm:$0xff]
    %v225 = vld [vmem:[#allocation5 + $0x190] sm:$0xff]
    %v226 = vld [vmem:[#allocation5 + $0x198] sm:$0xff]
    %v227 = vld [vmem:[#allocation5 + $0x1a0] sm:$0xff]
    %v228 = vld [vmem:[#allocation5 + $0x1a8] sm:$0xff]
    %v229 = vld [vmem:[#allocation5 + $0x1b0] sm:$0xff]
    %v230 = vld [vmem:[#allocation5 + $0x1b8] sm:$0xff]
    %v231 = vld [vmem:[#allocation5 + $0x1c0] sm:$0xff]
    %v232 = vld [vmem:[#allocation5 + $0x1c8] sm:$0xff]
    %v233 = vld [vmem:[#allocation5 + $0x1d0] sm:$0xff]
    %v234 = vld [vmem:[#allocation5 + $0x1d8] sm:$0xff]
    %v235 = vld [vmem:[#allocation5 + $0x1e0] sm:$0xff]
    %v236 = vld [vmem:[#allocation5 + $0x1e8] sm:$0xff]
    %v237 = vld [vmem:[#allocation5 + $0x1f0] sm:$0xff]
    %v238 = vld [vmem:[#allocation5 + $0x1f8] sm:$0xff]
    %v239 = vld [vmem:[#allocation5 + $0x200] sm:$0xff]
    %v240 = vld [vmem:[#allocation5 + $0x208] sm:$0xff]
    %v241 = vld [vmem:[#allocation5 + $0x210] sm:$0xff]
    %v242 = vld [vmem:[#allocation5 + $0x218] sm:$0xff]
    %v243 = vld [vmem:[#allocation5 + $0x220] sm:$0xff]
    %v244 = vld [vmem:[#allocation5 + $0x228] sm:$0xff]
    %v245 = vld [vmem:[#allocation5 + $0x230] sm:$0xff]
    %v246 = vld [vmem:[#allocation5 + $0x238] sm:$0xff]
    %v247 = vld [vmem:[#allocation5 + $0x240] sm:$0xff]
    %v248 = vld [vmem:[#allocation5 + $0x248] sm:$0xff]
    %v249 = vld [vmem:[#allocation5 + $0x250] sm:$0xff]
    %v250 = vld [vmem:[#allocation5 + $0x258] sm:$0xff]
    %v251 = vld [vmem:[#allocation5 + $0x260] sm:$0xff]
    %v252 = vld [vmem:[#allocation5 + $0x268] sm:$0xff]
    %v253 = vld [vmem:[#allocation5 + $0x270] sm:$0xff]
    %v254 = vld [vmem:[#allocation5 + $0x278] sm:$0xff]
    %v255 = vld [vmem:[#allocation5 + $0x280] sm:$0xff]
    %v256 = vld [vmem:[#allocation5 + $0x288] sm:$0xff]
    %v257 = vld [vmem:[#allocation5 + $0x290] sm:$0xff]
    %v258 = vld [vmem:[#allocation5 + $0x298] sm:$0xff]
    %v259 = vld [vmem:[#allocation5 + $0x2a0] sm:$0xff]
    %v260 = vld [vmem:[#allocation5 + $0x2a8] sm:$0xff]
    %v261 = vld [vmem:[#allocation5 + $0x2b0] sm:$0xff]
    %v262 = vld [vmem:[#allocation5 + $0x2b8] sm:$0xff]
    %v263 = vld [vmem:[#allocation5 + $0x2c0] sm:$0xff]
    %v264 = vld [vmem:[#allocation5 + $0x2c8] sm:$0xff]
    %v265 = vld [vmem:[#allocation5 + $0x2d0] sm:$0xff]
    %v266 = vld [vmem:[#allocation5 + $0x2d8] sm:$0xff]
    %v267 = vld [vmem:[#allocation5 + $0x2e0] sm:$0xff]
    %v268 = vld [vmem:[#allocation5 + $0x2e8] sm:$0xff]
    %v269 = vld [vmem:[#allocation5 + $0x2f0] sm:$0xff]
    %v270 = vld [vmem:[#allocation5 + $0x2f8] sm:$0xff]
    %v271 = vld [vmem:[#allocation5 + $0x300] sm:$0xff]
    %v272 = vld [vmem:[#allocation5 + $0x308] sm:$0xff]
    %v273 = vld [vmem:[#allocation5 + $0x310] sm:$0xff]
    %v274 = vld [vmem:[#allocation5 + $0x318] sm:$0xff]
    %v275 = vld [vmem:[#allocation5 + $0x320] sm:$0xff]
    %v276 = vld [vmem:[#allocation5 + $0x328] sm:$0xff]
    %v277 = vld [vmem:[#allocation5 + $0x330] sm:$0xff]
    %v278 = vld [vmem:[#allocation5 + $0x338] sm:$0xff]
    %v279 = vld [vmem:[#allocation5 + $0x340] sm:$0xff]
    %v280 = vld [vmem:[#allocation5 + $0x348] sm:$0xff]
    %v281 = vld [vmem:[#allocation5 + $0x350] sm:$0xff]
    %v282 = vld [vmem:[#allocation5 + $0x358] sm:$0xff]
    %v283 = vld [vmem:[#allocation5 + $0x360] sm:$0xff]
    %v284 = vld [vmem:[#allocation5 + $0x368] sm:$0xff]
    %v285 = vld [vmem:[#allocation5 + $0x370] sm:$0xff]
    %v286 = vld [vmem:[#allocation5 + $0x378] sm:$0xff]
    %v287 = vld [vmem:[#allocation5 + $0x380] sm:$0xff]
    %v288 = vld [vmem:[#allocation5 + $0x388] sm:$0xff]
    %v289 = vld [vmem:[#allocation5 + $0x390] sm:$0xff]
    %v290 = vld [vmem:[#allocation5 + $0x398] sm:$0xff]
    %v291 = vld [vmem:[#allocation5 + $0x3a0] sm:$0xff]
    %v292 = vld [vmem:[#allocation5 + $0x3a8] sm:$0xff]
    %v293 = vld [vmem:[#allocation5 + $0x3b0] sm:$0xff]
    %v294 = vld [vmem:[#allocation5 + $0x3b8] sm:$0xff]
    %v295 = vld [vmem:[#allocation5 + $0x3c0] sm:$0xff]
    %v296 = vld [vmem:[#allocation5 + $0x3c8] sm:$0xff]
    %v297 = vld [vmem:[#allocation5 + $0x3d0] sm:$0xff]
    %v298 = vld [vmem:[#allocation5 + $0x3d8] sm:$0xff]
    %v299 = vld [vmem:[#allocation5 + $0x3e0] sm:$0xff]
    %v300 = vld [vmem:[#allocation5 + $0x3e8] sm:$0xff]
    %v301 = vld [vmem:[#allocation5 + $0x3f0] sm:$0xff]
    %v302 = vld [vmem:[#allocation5 + $0x3f8] sm:$0xff]
    %v303 = vunpack.c.l.s8.bf16 %v175
    %v304 = vunpack.c.l.s8.bf16 %v176
    %v305 = vunpack.c.l.s8.bf16 %v177
    %v306 = vunpack.c.l.s8.bf16 %v178
    %v307 = vunpack.c.h.s8.bf16 %v175
    %v308 = vunpack.c.h.s8.bf16 %v176
    %v309 = vunpack.c.h.s8.bf16 %v177
    %v310 = vunpack.c.h.s8.bf16 %v178
    %v311 = vunpack.c.l.s8.bf16 %v179
    %v312 = vunpack.c.l.s8.bf16 %v180
    %v313 = vunpack.c.l.s8.bf16 %v181
    %v314 = vunpack.c.l.s8.bf16 %v182
    %v315 = vunpack.c.h.s8.bf16 %v179
    %v316 = vunpack.c.h.s8.bf16 %v180
    %v317 = vunpack.c.h.s8.bf16 %v181
    %v318 = vunpack.c.h.s8.bf16 %v182
    %v319 = vunpack.c.l.s8.bf16 %v183
    %v320 = vunpack.c.l.s8.bf16 %v184
    %v321 = vunpack.c.l.s8.bf16 %v185
    %v322 = vunpack.c.l.s8.bf16 %v186
    %v323 = vunpack.c.h.s8.bf16 %v183
    %v324 = vunpack.c.h.s8.bf16 %v184
    %v325 = vunpack.c.h.s8.bf16 %v185
    %v326 = vunpack.c.h.s8.bf16 %v186
    %v327 = vunpack.c.l.s8.bf16 %v187
    %v328 = vunpack.c.l.s8.bf16 %v188
    %v329 = vunpack.c.l.s8.bf16 %v189
    %v330 = vunpack.c.l.s8.bf16 %v190
    %v331 = vunpack.c.h.s8.bf16 %v187
    %v332 = vunpack.c.h.s8.bf16 %v188
    %v333 = vunpack.c.h.s8.bf16 %v189
    %v334 = vunpack.c.h.s8.bf16 %v190
    %v335 = vunpack.c.l.s8.bf16 %v191
    %v336 = vunpack.c.l.s8.bf16 %v192
    %v337 = vunpack.c.l.s8.bf16 %v193
    %v338 = vunpack.c.l.s8.bf16 %v194
    %v339 = vunpack.c.h.s8.bf16 %v191
    %v340 = vunpack.c.h.s8.bf16 %v192
    %v341 = vunpack.c.h.s8.bf16 %v193
    %v342 = vunpack.c.h.s8.bf16 %v194
    %v343 = vunpack.c.l.s8.bf16 %v195
    %v344 = vunpack.c.l.s8.bf16 %v196
    %v345 = vunpack.c.l.s8.bf16 %v197
    %v346 = vunpack.c.l.s8.bf16 %v198
    %v347 = vunpack.c.h.s8.bf16 %v195
    %v348 = vunpack.c.h.s8.bf16 %v196
    %v349 = vunpack.c.h.s8.bf16 %v197
    %v350 = vunpack.c.h.s8.bf16 %v198
    %v351 = vunpack.c.l.s8.bf16 %v199
    %v352 = vunpack.c.l.s8.bf16 %v200
    %v353 = vunpack.c.l.s8.bf16 %v201
    %v354 = vunpack.c.l.s8.bf16 %v202
    %v355 = vunpack.c.h.s8.bf16 %v199
    %v356 = vunpack.c.h.s8.bf16 %v200
    %v357 = vunpack.c.h.s8.bf16 %v201
    %v358 = vunpack.c.h.s8.bf16 %v202
    %v359 = vunpack.c.l.s8.bf16 %v203
    %v360 = vunpack.c.l.s8.bf16 %v204
    %v361 = vunpack.c.l.s8.bf16 %v205
    %v362 = vunpack.c.l.s8.bf16 %v206
    %v363 = vunpack.c.h.s8.bf16 %v203
    %v364 = vunpack.c.h.s8.bf16 %v204
    %v365 = vunpack.c.h.s8.bf16 %v205
    %v366 = vunpack.c.h.s8.bf16 %v206
    %v367 = vunpack.c.l.s8.bf16 %v207
    %v368 = vunpack.c.l.s8.bf16 %v208
    %v369 = vunpack.c.l.s8.bf16 %v209
    %v370 = vunpack.c.l.s8.bf16 %v210
    %v371 = vunpack.c.h.s8.bf16 %v207
    %v372 = vunpack.c.h.s8.bf16 %v208
    %v373 = vunpack.c.h.s8.bf16 %v209
    %v374 = vunpack.c.h.s8.bf16 %v210
    %v375 = vunpack.c.l.s8.bf16 %v211
    %v376 = vunpack.c.l.s8.bf16 %v212
    %v377 = vunpack.c.l.s8.bf16 %v213
    %v378 = vunpack.c.l.s8.bf16 %v214
    %v379 = vunpack.c.h.s8.bf16 %v211
    %v380 = vunpack.c.h.s8.bf16 %v212
    %v381 = vunpack.c.h.s8.bf16 %v213
    %v382 = vunpack.c.h.s8.bf16 %v214
    %v383 = vunpack.c.l.s8.bf16 %v215
    %v384 = vunpack.c.l.s8.bf16 %v216
    %v385 = vunpack.c.l.s8.bf16 %v217
    %v386 = vunpack.c.l.s8.bf16 %v218
    %v387 = vunpack.c.h.s8.bf16 %v215
    %v388 = vunpack.c.h.s8.bf16 %v216
    %v389 = vunpack.c.h.s8.bf16 %v217
    %v390 = vunpack.c.h.s8.bf16 %v218
    %v391 = vunpack.c.l.s8.bf16 %v219
    %v392 = vunpack.c.l.s8.bf16 %v220
    %v393 = vunpack.c.l.s8.bf16 %v221
    %v394 = vunpack.c.l.s8.bf16 %v222
    %v395 = vunpack.c.h.s8.bf16 %v219
    %v396 = vunpack.c.h.s8.bf16 %v220
    %v397 = vunpack.c.h.s8.bf16 %v221
    %v398 = vunpack.c.h.s8.bf16 %v222
    %v399 = vunpack.c.l.s8.bf16 %v223
    %v400 = vunpack.c.l.s8.bf16 %v224
    %v401 = vunpack.c.l.s8.bf16 %v225
    %v402 = vunpack.c.l.s8.bf16 %v226
    %v403 = vunpack.c.h.s8.bf16 %v223
    %v404 = vunpack.c.h.s8.bf16 %v224
    %v405 = vunpack.c.h.s8.bf16 %v225
    %v406 = vunpack.c.h.s8.bf16 %v226
    %v407 = vunpack.c.l.s8.bf16 %v227
    %v408 = vunpack.c.l.s8.bf16 %v228
    %v409 = vunpack.c.l.s8.bf16 %v229
    %v410 = vunpack.c.l.s8.bf16 %v230
    %v411 = vunpack.c.h.s8.bf16 %v227
    %v412 = vunpack.c.h.s8.bf16 %v228
    %v413 = vunpack.c.h.s8.bf16 %v229
    %v414 = vunpack.c.h.s8.bf16 %v230
    %v415 = vunpack.c.l.s8.bf16 %v231
    %v416 = vunpack.c.l.s8.bf16 %v232
    %v417 = vunpack.c.l.s8.bf16 %v233
    %v418 = vunpack.c.l.s8.bf16 %v234
    %v419 = vunpack.c.h.s8.bf16 %v231
    %v420 = vunpack.c.h.s8.bf16 %v232
    %v421 = vunpack.c.h.s8.bf16 %v233
    %v422 = vunpack.c.h.s8.bf16 %v234
    %v423 = vunpack.c.l.s8.bf16 %v235
    %v424 = vunpack.c.l.s8.bf16 %v236
    %v425 = vunpack.c.l.s8.bf16 %v237
    %v426 = vunpack.c.l.s8.bf16 %v238
    %v427 = vunpack.c.h.s8.bf16 %v235
    %v428 = vunpack.c.h.s8.bf16 %v236
    %v429 = vunpack.c.h.s8.bf16 %v237
    %v430 = vunpack.c.h.s8.bf16 %v238
    %v431 = vunpack.c.l.s8.bf16 %v239
    %v432 = vunpack.c.l.s8.bf16 %v240
    %v433 = vunpack.c.l.s8.bf16 %v241
    %v434 = vunpack.c.l.s8.bf16 %v242
    %v435 = vunpack.c.h.s8.bf16 %v239
    %v436 = vunpack.c.h.s8.bf16 %v240
    %v437 = vunpack.c.h.s8.bf16 %v241
    %v438 = vunpack.c.h.s8.bf16 %v242
    %v439 = vunpack.c.l.s8.bf16 %v243
    %v440 = vunpack.c.l.s8.bf16 %v244
    %v441 = vunpack.c.l.s8.bf16 %v245
    %v442 = vunpack.c.l.s8.bf16 %v246
    %v443 = vunpack.c.h.s8.bf16 %v243
    %v444 = vunpack.c.h.s8.bf16 %v244
    %v445 = vunpack.c.h.s8.bf16 %v245
    %v446 = vunpack.c.h.s8.bf16 %v246
    %v447 = vunpack.c.l.s8.bf16 %v247
    %v448 = vunpack.c.l.s8.bf16 %v248
    %v449 = vunpack.c.l.s8.bf16 %v249
    %v450 = vunpack.c.l.s8.bf16 %v250
    %v451 = vunpack.c.h.s8.bf16 %v247
    %v452 = vunpack.c.h.s8.bf16 %v248
    %v453 = vunpack.c.h.s8.bf16 %v249
    %v454 = vunpack.c.h.s8.bf16 %v250
    %v455 = vunpack.c.l.s8.bf16 %v251
    %v456 = vunpack.c.l.s8.bf16 %v252
    %v457 = vunpack.c.l.s8.bf16 %v253
    %v458 = vunpack.c.l.s8.bf16 %v254
    %v459 = vunpack.c.h.s8.bf16 %v251
    %v460 = vunpack.c.h.s8.bf16 %v252
    %v461 = vunpack.c.h.s8.bf16 %v253
    %v462 = vunpack.c.h.s8.bf16 %v254
    %v463 = vunpack.c.l.s8.bf16 %v255
    %v464 = vunpack.c.l.s8.bf16 %v256
    %v465 = vunpack.c.l.s8.bf16 %v257
    %v466 = vunpack.c.l.s8.bf16 %v258
    %v467 = vunpack.c.h.s8.bf16 %v255
    %v468 = vunpack.c.h.s8.bf16 %v256
    %v469 = vunpack.c.h.s8.bf16 %v257
    %v470 = vunpack.c.h.s8.bf16 %v258
    %v471 = vunpack.c.l.s8.bf16 %v259
    %v472 = vunpack.c.l.s8.bf16 %v260
    %v473 = vunpack.c.l.s8.bf16 %v261
    %v474 = vunpack.c.l.s8.bf16 %v262
    %v475 = vunpack.c.h.s8.bf16 %v259
    %v476 = vunpack.c.h.s8.bf16 %v260
    %v477 = vunpack.c.h.s8.bf16 %v261
    %v478 = vunpack.c.h.s8.bf16 %v262
    %v479 = vunpack.c.l.s8.bf16 %v263
    %v480 = vunpack.c.l.s8.bf16 %v264
    %v481 = vunpack.c.l.s8.bf16 %v265
    %v482 = vunpack.c.l.s8.bf16 %v266
    %v483 = vunpack.c.h.s8.bf16 %v263
    %v484 = vunpack.c.h.s8.bf16 %v264
    %v485 = vunpack.c.h.s8.bf16 %v265
    %v486 = vunpack.c.h.s8.bf16 %v266
    %v487 = vunpack.c.l.s8.bf16 %v267
    %v488 = vunpack.c.l.s8.bf16 %v268
    %v489 = vunpack.c.l.s8.bf16 %v269
    %v490 = vunpack.c.l.s8.bf16 %v270
    %v491 = vunpack.c.h.s8.bf16 %v267
    %v492 = vunpack.c.h.s8.bf16 %v268
    %v493 = vunpack.c.h.s8.bf16 %v269
    %v494 = vunpack.c.h.s8.bf16 %v270
    %v495 = vunpack.c.l.s8.bf16 %v271
    %v496 = vunpack.c.l.s8.bf16 %v272
    %v497 = vunpack.c.l.s8.bf16 %v273
    %v498 = vunpack.c.l.s8.bf16 %v274
    %v499 = vunpack.c.h.s8.bf16 %v271
    %v500 = vunpack.c.h.s8.bf16 %v272
    %v501 = vunpack.c.h.s8.bf16 %v273
    %v502 = vunpack.c.h.s8.bf16 %v274
    %v503 = vunpack.c.l.s8.bf16 %v275
    %v504 = vunpack.c.l.s8.bf16 %v276
    %v505 = vunpack.c.l.s8.bf16 %v277
    %v506 = vunpack.c.l.s8.bf16 %v278
    %v507 = vunpack.c.h.s8.bf16 %v275
    %v508 = vunpack.c.h.s8.bf16 %v276
    %v509 = vunpack.c.h.s8.bf16 %v277
    %v510 = vunpack.c.h.s8.bf16 %v278
    %v511 = vunpack.c.l.s8.bf16 %v279
    %v512 = vunpack.c.l.s8.bf16 %v280
    %v513 = vunpack.c.l.s8.bf16 %v281
    %v514 = vunpack.c.l.s8.bf16 %v282
    %v515 = vunpack.c.h.s8.bf16 %v279
    %v516 = vunpack.c.h.s8.bf16 %v280
    %v517 = vunpack.c.h.s8.bf16 %v281
    %v518 = vunpack.c.h.s8.bf16 %v282
    %v519 = vunpack.c.l.s8.bf16 %v283
    %v520 = vunpack.c.l.s8.bf16 %v284
    %v521 = vunpack.c.l.s8.bf16 %v285
    %v522 = vunpack.c.l.s8.bf16 %v286
    %v523 = vunpack.c.h.s8.bf16 %v283
    %v524 = vunpack.c.h.s8.bf16 %v284
    %v525 = vunpack.c.h.s8.bf16 %v285
    %v526 = vunpack.c.h.s8.bf16 %v286
    %v527 = vunpack.c.l.s8.bf16 %v287
    %v528 = vunpack.c.l.s8.bf16 %v288
    %v529 = vunpack.c.l.s8.bf16 %v289
    %v530 = vunpack.c.l.s8.bf16 %v290
    %v531 = vunpack.c.h.s8.bf16 %v287
    %v532 = vunpack.c.h.s8.bf16 %v288
    %v533 = vunpack.c.h.s8.bf16 %v289
    %v534 = vunpack.c.h.s8.bf16 %v290
    %v535 = vunpack.c.l.s8.bf16 %v291
    %v536 = vunpack.c.l.s8.bf16 %v292
    %v537 = vunpack.c.l.s8.bf16 %v293
    %v538 = vunpack.c.l.s8.bf16 %v294
    %v539 = vunpack.c.h.s8.bf16 %v291
    %v540 = vunpack.c.h.s8.bf16 %v292
    %v541 = vunpack.c.h.s8.bf16 %v293
    %v542 = vunpack.c.h.s8.bf16 %v294
    %v543 = vunpack.c.l.s8.bf16 %v295
    %v544 = vunpack.c.l.s8.bf16 %v296
    %v545 = vunpack.c.l.s8.bf16 %v297
    %v546 = vunpack.c.l.s8.bf16 %v298
    %v547 = vunpack.c.h.s8.bf16 %v295
    %v548 = vunpack.c.h.s8.bf16 %v296
    %v549 = vunpack.c.h.s8.bf16 %v297
    %v550 = vunpack.c.h.s8.bf16 %v298
    %v551 = vunpack.c.l.s8.bf16 %v299
    %v552 = vunpack.c.l.s8.bf16 %v300
    %v553 = vunpack.c.l.s8.bf16 %v301
    %v554 = vunpack.c.l.s8.bf16 %v302
    %v555 = vunpack.c.h.s8.bf16 %v299
    %v556 = vunpack.c.h.s8.bf16 %v300
    %v557 = vunpack.c.h.s8.bf16 %v301
    %v558 = vunpack.c.h.s8.bf16 %v302
    %559 = vmatprep.subr.bf16.mxu0 %v304
    %560 = vmatpush1.bf16.msra.mxu0 %v303
    %561 = vmatprep.subr.bf16.mxu0 %v308
    %562 = vmatpush1.bf16.msra.mxu0 %v307
    %563 = vmatprep.subr.bf16.mxu0 %v312
    %564 = vmatpush1.bf16.msra.mxu0 %v311
    %565 = vmatprep.subr.bf16.mxu0 %v316
    %566 = vmatpush1.bf16.msra.mxu0 %v315
    %567 = vmatprep.subr.bf16.mxu0 %v320
    %568 = vmatpush1.bf16.msra.mxu0 %v319
    %569 = vmatprep.subr.bf16.mxu0 %v324
    %570 = vmatpush1.bf16.msra.mxu0 %v323
    %571 = vmatprep.subr.bf16.mxu0 %v328
    %572 = vmatpush1.bf16.msra.mxu0 %v327
    %573 = vmatprep.subr.bf16.mxu0 %v332
    %574 = vmatpush1.bf16.msra.mxu0 %v331
    %575 = vmatprep.subr.bf16.mxu0 %v336
    %576 = vmatpush1.bf16.msra.mxu0 %v335
    %577 = vmatprep.subr.bf16.mxu0 %v340
    %578 = vmatpush1.bf16.msra.mxu0 %v339
    %579 = vmatprep.subr.bf16.mxu0 %v344
    %580 = vmatpush1.bf16.msra.mxu0 %v343
    %581 = vmatprep.subr.bf16.mxu0 %v348
    %582 = vmatpush1.bf16.msra.mxu0 %v347
    %583 = vmatprep.subr.bf16.mxu0 %v352
    %584 = vmatpush1.bf16.msra.mxu0 %v351
    %585 = vmatprep.subr.bf16.mxu0 %v356
    %586 = vmatpush1.bf16.msra.mxu0 %v355
    %587 = vmatprep.subr.bf16.mxu0 %v360
    %588 = vmatpush1.bf16.msra.mxu0 %v359
    %589 = vmatprep.subr.bf16.mxu0 %v364
    %590 = vmatpush1.bf16.msra.mxu0 %v363
    %591 = vmatprep.mubr.bf16.mxu0 %v168
    %592 = vmatmul.mubr.bf16.gmra.mrb[0].mxu0 %v167
    %v593 = vpop.f32.mrb[0].mxu0
    %v594 = vadd.f32 0.0, %v593
    %v595 = vpop.f32.mrb[0].mxu0
    %v596 = vadd.f32 0.0, %v595
    %v597 = vpop.f32.mrb[0].mxu0
    %v598 = vadd.f32 0.0, %v597
    %v599 = vpop.f32.mrb[0].mxu0
    %v600 = vadd.f32 0.0, %v599
    %601 = vdwg.mxu0
    %602 = vmatprep.subr.bf16.mxu0 %v368
    %603 = vmatpush1.bf16.msra.mxu0 %v367
    %604 = vmatprep.subr.bf16.mxu0 %v372
    %605 = vmatpush1.bf16.msra.mxu0 %v371
    %606 = vmatprep.subr.bf16.mxu0 %v376
    %607 = vmatpush1.bf16.msra.mxu0 %v375
    %608 = vmatprep.subr.bf16.mxu0 %v380
    %609 = vmatpush1.bf16.msra.mxu0 %v379
    %610 = vmatprep.subr.bf16.mxu0 %v384
    %611 = vmatpush1.bf16.msra.mxu0 %v383
    %612 = vmatprep.subr.bf16.mxu0 %v388
    %613 = vmatpush1.bf16.msra.mxu0 %v387
    %614 = vmatprep.subr.bf16.mxu0 %v392
    %615 = vmatpush1.bf16.msra.mxu0 %v391
    %616 = vmatprep.subr.bf16.mxu0 %v396
    %617 = vmatpush1.bf16.msra.mxu0 %v395
    %618 = vmatprep.subr.bf16.mxu0 %v400
    %619 = vmatpush1.bf16.msra.mxu0 %v399
    %620 = vmatprep.subr.bf16.mxu0 %v404
    %621 = vmatpush1.bf16.msra.mxu0 %v403
    %622 = vmatprep.subr.bf16.mxu0 %v408
    %623 = vmatpush1.bf16.msra.mxu0 %v407
    %624 = vmatprep.subr.bf16.mxu0 %v412
    %625 = vmatpush1.bf16.msra.mxu0 %v411
    %626 = vmatprep.subr.bf16.mxu0 %v416
    %627 = vmatpush1.bf16.msra.mxu0 %v415
    %628 = vmatprep.subr.bf16.mxu0 %v420
    %629 = vmatpush1.bf16.msra.mxu0 %v419
    %630 = vmatprep.subr.bf16.mxu0 %v424
    %631 = vmatpush1.bf16.msra.mxu0 %v423
    %632 = vmatprep.subr.bf16.mxu0 %v428
    %633 = vmatpush1.bf16.msra.mxu0 %v427
    %634 = vmatprep.mubr.bf16.mxu0 %v170
    %635 = vmatmul.mubr.bf16.gmra.mrb[0].mxu0 %v169
    %v636 = vpop.f32.mrb[0].mxu0
    %v637 = vadd.f32 %v594, %v636
    %v638 = vpop.f32.mrb[0].mxu0
    %v639 = vadd.f32 %v596, %v638
    %v640 = vpop.f32.mrb[0].mxu0
    %v641 = vadd.f32 %v598, %v640
    %v642 = vpop.f32.mrb[0].mxu0
    %v643 = vadd.f32 %v600, %v642
    %644 = vdwg.mxu0
    %645 = vmatprep.subr.bf16.mxu0 %v432
    %646 = vmatpush1.bf16.msra.mxu0 %v431
    %647 = vmatprep.subr.bf16.mxu0 %v436
    %648 = vmatpush1.bf16.msra.mxu0 %v435
    %649 = vmatprep.subr.bf16.mxu0 %v440
    %650 = vmatpush1.bf16.msra.mxu0 %v439
    %651 = vmatprep.subr.bf16.mxu0 %v444
    %652 = vmatpush1.bf16.msra.mxu0 %v443
    %653 = vmatprep.subr.bf16.mxu0 %v448
    %654 = vmatpush1.bf16.msra.mxu0 %v447
    %655 = vmatprep.subr.bf16.mxu0 %v452
    %656 = vmatpush1.bf16.msra.mxu0 %v451
    %657 = vmatprep.subr.bf16.mxu0 %v456
    %658 = vmatpush1.bf16.msra.mxu0 %v455
    %659 = vmatprep.subr.bf16.mxu0 %v460
    %660 = vmatpush1.bf16.msra.mxu0 %v459
    %661 = vmatprep.subr.bf16.mxu0 %v464
    %662 = vmatpush1.bf16.msra.mxu0 %v463
    %663 = vmatprep.subr.bf16.mxu0 %v468
    %664 = vmatpush1.bf16.msra.mxu0 %v467
    %665 = vmatprep.subr.bf16.mxu0 %v472
    %666 = vmatpush1.bf16.msra.mxu0 %v471
    %667 = vmatprep.subr.bf16.mxu0 %v476
    %668 = vmatpush1.bf16.msra.mxu0 %v475
    %669 = vmatprep.subr.bf16.mxu0 %v480
    %670 = vmatpush1.bf16.msra.mxu0 %v479
    %671 = vmatprep.subr.bf16.mxu0 %v484
    %672 = vmatpush1.bf16.msra.mxu0 %v483
    %673 = vmatprep.subr.bf16.mxu0 %v488
    %674 = vmatpush1.bf16.msra.mxu0 %v487
    %675 = vmatprep.subr.bf16.mxu0 %v492
    %676 = vmatpush1.bf16.msra.mxu0 %v491
    %677 = vmatprep.mubr.bf16.mxu0 %v172
    %678 = vmatmul.mubr.bf16.gmra.mrb[0].mxu0 %v171
    %v679 = vpop.f32.mrb[0].mxu0
    %v680 = vadd.f32 %v637, %v679
    %v681 = vpop.f32.mrb[0].mxu0
    %v682 = vadd.f32 %v639, %v681
    %v683 = vpop.f32.mrb[0].mxu0
    %v684 = vadd.f32 %v641, %v683
    %v685 = vpop.f32.mrb[0].mxu0
    %v686 = vadd.f32 %v643, %v685
    %687 = vdwg.mxu0
    %688 = vmatprep.subr.bf16.mxu0 %v496
    %689 = vmatpush1.bf16.msra.mxu0 %v495
    %690 = vmatprep.subr.bf16.mxu0 %v500
    %691 = vmatpush1.bf16.msra.mxu0 %v499
    %692 = vmatprep.subr.bf16.mxu0 %v504
    %693 = vmatpush1.bf16.msra.mxu0 %v503
    %694 = vmatprep.subr.bf16.mxu0 %v508
    %695 = vmatpush1.bf16.msra.mxu0 %v507
    %696 = vmatprep.subr.bf16.mxu0 %v512
    %697 = vmatpush1.bf16.msra.mxu0 %v511
    %698 = vmatprep.subr.bf16.mxu0 %v516
    %699 = vmatpush1.bf16.msra.mxu0 %v515
    %700 = vmatprep.subr.bf16.mxu0 %v520
    %701 = vmatpush1.bf16.msra.mxu0 %v519
    %702 = vmatprep.subr.bf16.mxu0 %v524
    %703 = vmatpush1.bf16.msra.mxu0 %v523
    %704 = vmatprep.subr.bf16.mxu0 %v528
    %705 = vmatpush1.bf16.msra.mxu0 %v527
    %706 = vmatprep.subr.bf16.mxu0 %v532
    %707 = vmatpush1.bf16.msra.mxu0 %v531
    %708 = vmatprep.subr.bf16.mxu0 %v536
    %709 = vmatpush1.bf16.msra.mxu0 %v535
    %710 = vmatprep.subr.bf16.mxu0 %v540
    %711 = vmatpush1.bf16.msra.mxu0 %v539
    %712 = vmatprep.subr.bf16.mxu0 %v544
    %713 = vmatpush1.bf16.msra.mxu0 %v543
    %714 = vmatprep.subr.bf16.mxu0 %v548
    %715 = vmatpush1.bf16.msra.mxu0 %v547
    %716 = vmatprep.subr.bf16.mxu0 %v552
    %717 = vmatpush1.bf16.msra.mxu0 %v551
    %718 = vmatprep.subr.bf16.mxu0 %v556
    %719 = vmatpush1.bf16.msra.mxu0 %v555
    %720 = vmatprep.mubr.bf16.mxu0 %v174
    %721 = vmatmul.mubr.bf16.gmra.mrb[0].mxu0 %v173
    %v722 = vpop.f32.mrb[0].mxu0
    %v723 = vadd.f32 %v680, %v722
    %v724 = vpop.f32.mrb[0].mxu0
    %v725 = vadd.f32 %v682, %v724
    %v726 = vpop.f32.mrb[0].mxu0
    %v727 = vadd.f32 %v684, %v726
    %v728 = vpop.f32.mrb[0].mxu0
    %v729 = vadd.f32 %v686, %v728
    %730 = vdwg.mxu0
    %731 = vmatprep.subr.bf16.mxu0 %v306
    %732 = vmatpush1.bf16.msra.mxu0 %v305
    %733 = vmatprep.subr.bf16.mxu0 %v310
    %734 = vmatpush1.bf16.msra.mxu0 %v309
    %735 = vmatprep.subr.bf16.mxu0 %v314
    %736 = vmatpush1.bf16.msra.mxu0 %v313
    %737 = vmatprep.subr.bf16.mxu0 %v318
    %738 = vmatpush1.bf16.msra.mxu0 %v317
    %739 = vmatprep.subr.bf16.mxu0 %v322
    %740 = vmatpush1.bf16.msra.mxu0 %v321
    %741 = vmatprep.subr.bf16.mxu0 %v326
    %742 = vmatpush1.bf16.msra.mxu0 %v325
    %743 = vmatprep.subr.bf16.mxu0 %v330
    %744 = vmatpush1.bf16.msra.mxu0 %v329
    %745 = vmatprep.subr.bf16.mxu0 %v334
    %746 = vmatpush1.bf16.msra.mxu0 %v333
    %747 = vmatprep.subr.bf16.mxu0 %v338
    %748 = vmatpush1.bf16.msra.mxu0 %v337
    %749 = vmatprep.subr.bf16.mxu0 %v342
    %750 = vmatpush1.bf16.msra.mxu0 %v341
    %751 = vmatprep.subr.bf16.mxu0 %v346
    %752 = vmatpush1.bf16.msra.mxu0 %v345
    %753 = vmatprep.subr.bf16.mxu0 %v350
    %754 = vmatpush1.bf16.msra.mxu0 %v349
    %755 = vmatprep.subr.bf16.mxu0 %v354
    %756 = vmatpush1.bf16.msra.mxu0 %v353
    %757 = vmatprep.subr.bf16.mxu0 %v358
    %758 = vmatpush1.bf16.msra.mxu0 %v357
    %759 = vmatprep.subr.bf16.mxu0 %v362
    %760 = vmatpush1.bf16.msra.mxu0 %v361
    %761 = vmatprep.subr.bf16.mxu0 %v366
    %762 = vmatpush1.bf16.msra.mxu0 %v365
    %763 = vmatprep.mubr.bf16.mxu0 %v168
    %764 = vmatmul.mubr.bf16.gmra.mrb[0].mxu0 %v167
    %v765 = vpop.f32.mrb[0].mxu0
    %v766 = vadd.f32 0.0, %v765
    %v767 = vpop.f32.mrb[0].mxu0
    %v768 = vadd.f32 0.0, %v767
    %v769 = vpop.f32.mrb[0].mxu0
    %v770 = vadd.f32 0.0, %v769
    %v771 = vpop.f32.mrb[0].mxu0
    %v772 = vadd.f32 0.0, %v771
    %773 = vdwg.mxu0
    %774 = vmatprep.subr.bf16.mxu0 %v370
    %775 = vmatpush1.bf16.msra.mxu0 %v369
    %776 = vmatprep.subr.bf16.mxu0 %v374
    %777 = vmatpush1.bf16.msra.mxu0 %v373
    %778 = vmatprep.subr.bf16.mxu0 %v378
    %779 = vmatpush1.bf16.msra.mxu0 %v377
    %780 = vmatprep.subr.bf16.mxu0 %v382
    %781 = vmatpush1.bf16.msra.mxu0 %v381
    %782 = vmatprep.subr.bf16.mxu0 %v386
    %783 = vmatpush1.bf16.msra.mxu0 %v385
    %784 = vmatprep.subr.bf16.mxu0 %v390
    %785 = vmatpush1.bf16.msra.mxu0 %v389
    %786 = vmatprep.subr.bf16.mxu0 %v394
    %787 = vmatpush1.bf16.msra.mxu0 %v393
    %788 = vmatprep.subr.bf16.mxu0 %v398
    %789 = vmatpush1.bf16.msra.mxu0 %v397
    %790 = vmatprep.subr.bf16.mxu0 %v402
    %791 = vmatpush1.bf16.msra.mxu0 %v401
    %792 = vmatprep.subr.bf16.mxu0 %v406
    %793 = vmatpush1.bf16.msra.mxu0 %v405
    %794 = vmatprep.subr.bf16.mxu0 %v410
    %795 = vmatpush1.bf16.msra.mxu0 %v409
    %796 = vmatprep.subr.bf16.mxu0 %v414
    %797 = vmatpush1.bf16.msra.mxu0 %v413
    %798 = vmatprep.subr.bf16.mxu0 %v418
    %799 = vmatpush1.bf16.msra.mxu0 %v417
    %800 = vmatprep.subr.bf16.mxu0 %v422
    %801 = vmatpush1.bf16.msra.mxu0 %v421
    %802 = vmatprep.subr.bf16.mxu0 %v426
    %803 = vmatpush1.bf16.msra.mxu0 %v425
    %804 = vmatprep.subr.bf16.mxu0 %v430
    %805 = vmatpush1.bf16.msra.mxu0 %v429
    %806 = vmatprep.mubr.bf16.mxu0 %v170
    %807 = vmatmul.mubr.bf16.gmra.mrb[0].mxu0 %v169
    %v808 = vpop.f32.mrb[0].mxu0
    %v809 = vadd.f32 %v766, %v808
    %v810 = vpop.f32.mrb[0].mxu0
    %v811 = vadd.f32 %v768, %v810
    %v812 = vpop.f32.mrb[0].mxu0
    %v813 = vadd.f32 %v770, %v812
    %v814 = vpop.f32.mrb[0].mxu0
    %v815 = vadd.f32 %v772, %v814
    %816 = vdwg.mxu0
    %817 = vmatprep.subr.bf16.mxu0 %v434
    %818 = vmatpush1.bf16.msra.mxu0 %v433
    %819 = vmatprep.subr.bf16.mxu0 %v438
    %820 = vmatpush1.bf16.msra.mxu0 %v437
    %821 = vmatprep.subr.bf16.mxu0 %v442
    %822 = vmatpush1.bf16.msra.mxu0 %v441
    %823 = vmatprep.subr.bf16.mxu0 %v446
    %824 = vmatpush1.bf16.msra.mxu0 %v445
    %825 = vmatprep.subr.bf16.mxu0 %v450
    %826 = vmatpush1.bf16.msra.mxu0 %v449
    %827 = vmatprep.subr.bf16.mxu0 %v454
    %828 = vmatpush1.bf16.msra.mxu0 %v453
    %829 = vmatprep.subr.bf16.mxu0 %v458
    %830 = vmatpush1.bf16.msra.mxu0 %v457
    %831 = vmatprep.subr.bf16.mxu0 %v462
    %832 = vmatpush1.bf16.msra.mxu0 %v461
    %833 = vmatprep.subr.bf16.mxu0 %v466
    %834 = vmatpush1.bf16.msra.mxu0 %v465
    %835 = vmatprep.subr.bf16.mxu0 %v470
    %836 = vmatpush1.bf16.msra.mxu0 %v469
    %837 = vmatprep.subr.bf16.mxu0 %v474
    %838 = vmatpush1.bf16.msra.mxu0 %v473
    %839 = vmatprep.subr.bf16.mxu0 %v478
    %840 = vmatpush1.bf16.msra.mxu0 %v477
    %841 = vmatprep.subr.bf16.mxu0 %v482
    %842 = vmatpush1.bf16.msra.mxu0 %v481
    %843 = vmatprep.subr.bf16.mxu0 %v486
    %844 = vmatpush1.bf16.msra.mxu0 %v485
    %845 = vmatprep.subr.bf16.mxu0 %v490
    %846 = vmatpush1.bf16.msra.mxu0 %v489
    %847 = vmatprep.subr.bf16.mxu0 %v494
    %848 = vmatpush1.bf16.msra.mxu0 %v493
    %849 = vmatprep.mubr.bf16.mxu0 %v172
    %850 = vmatmul.mubr.bf16.gmra.mrb[0].mxu0 %v171
    %v851 = vpop.f32.mrb[0].mxu0
    %v852 = vadd.f32 %v809, %v851
    %v853 = vpop.f32.mrb[0].mxu0
    %v854 = vadd.f32 %v811, %v853
    %v855 = vpop.f32.mrb[0].mxu0
    %v856 = vadd.f32 %v813, %v855
    %v857 = vpop.f32.mrb[0].mxu0
    %v858 = vadd.f32 %v815, %v857
    %859 = vdwg.mxu0
    %860 = vmatprep.subr.bf16.mxu0 %v498
    %861 = vmatpush1.bf16.msra.mxu0 %v497
    %862 = vmatprep.subr.bf16.mxu0 %v502
    %863 = vmatpush1.bf16.msra.mxu0 %v501
    %864 = vmatprep.subr.bf16.mxu0 %v506
    %865 = vmatpush1.bf16.msra.mxu0 %v505
    %866 = vmatprep.subr.bf16.mxu0 %v510
    %867 = vmatpush1.bf16.msra.mxu0 %v509
    %868 = vmatprep.subr.bf16.mxu0 %v514
    %869 = vmatpush1.bf16.msra.mxu0 %v513
    %870 = vmatprep.subr.bf16.mxu0 %v518
    %871 = vmatpush1.bf16.msra.mxu0 %v517
    %872 = vmatprep.subr.bf16.mxu0 %v522
    %873 = vmatpush1.bf16.msra.mxu0 %v521
    %874 = vmatprep.subr.bf16.mxu0 %v526
    %875 = vmatpush1.bf16.msra.mxu0 %v525
    %876 = vmatprep.subr.bf16.mxu0 %v530
    %877 = vmatpush1.bf16.msra.mxu0 %v529
    %878 = vmatprep.subr.bf16.mxu0 %v534
    %879 = vmatpush1.bf16.msra.mxu0 %v533
    %880 = vmatprep.subr.bf16.mxu0 %v538
    %881 = vmatpush1.bf16.msra.mxu0 %v537
    %882 = vmatprep.subr.bf16.mxu0 %v542
    %883 = vmatpush1.bf16.msra.mxu0 %v541
    %884 = vmatprep.subr.bf16.mxu0 %v546
    %885 = vmatpush1.bf16.msra.mxu0 %v545
    %886 = vmatprep.subr.bf16.mxu0 %v550
    %887 = vmatpush1.bf16.msra.mxu0 %v549
    %888 = vmatprep.subr.bf16.mxu0 %v554
    %889 = vmatpush1.bf16.msra.mxu0 %v553
    %890 = vmatprep.subr.bf16.mxu0 %v558
    %891 = vmatpush1.bf16.msra.mxu0 %v557
    %892 = vmatprep.mubr.bf16.mxu0 %v174
    %893 = vmatmul.mubr.bf16.gmra.mrb[0].mxu0 %v173
    %v894 = vpop.f32.mrb[0].mxu0
    %v895 = vadd.f32 %v852, %v894
    %v896 = vpop.f32.mrb[0].mxu0
    %v897 = vadd.f32 %v854, %v896
    %v898 = vpop.f32.mrb[0].mxu0
    %v899 = vadd.f32 %v856, %v898
    %v900 = vpop.f32.mrb[0].mxu0
    %v901 = vadd.f32 %v858, %v900
    %902 = vdwg.mxu0
    %s903 = scalar_lea.vmem %s2, 1
    %v904 = vld [vmem:[%s903] ss:$8 sm:$0xf]
    %v906 = vlaneseq
    %v907 = vshrl.u32 %v906, 7
    %v908 = vsub.s32 0, %v907
    %v909 = vrot.slane %v904, %v908
    %v910 = vlaneseq
    %v911 = vshrl.u32 %v910, 7
    %v912 = vsub.s32 1, %v911
    %v913 = vrot.slane %v904, %v912
    %v914 = vlaneseq
    %v915 = vshrl.u32 %v914, 7
    %v916 = vsub.s32 2, %v915
    %v917 = vrot.slane %v904, %v916
    %v918 = vlaneseq
    %v919 = vshrl.u32 %v918, 7
    %v920 = vsub.s32 3, %v919
    %v921 = vrot.slane %v904, %v920
    %v926 = vmul.f32 %v723, %v909
    %v927 = vmul.f32 %v725, %v913
    %v928 = vmul.f32 %v895, %v917
    %v929 = vmul.f32 %v897, %v921
    %v930 = vmul.f32 %v727, %v909
    %v931 = vmul.f32 %v729, %v913
    %v932 = vmul.f32 %v899, %v917
    %v933 = vmul.f32 %v901, %v921
    %v934 = vld [vmem:[%s2] ss:$8 sm:$0xf]
    %v936 = vlaneseq
    %v937 = vshrl.u32 %v936, 7
    %v938 = vsub.s32 0, %v937
    %v939 = vrot.slane %v934, %v938
    %v940 = vlaneseq
    %v941 = vshrl.u32 %v940, 7
    %v942 = vsub.s32 1, %v941
    %v943 = vrot.slane %v934, %v942
    %v944 = vlaneseq
    %v945 = vshrl.u32 %v944, 7
    %v946 = vsub.s32 2, %v945
    %v947 = vrot.slane %v934, %v946
    %v948 = vlaneseq
    %v949 = vshrl.u32 %v948, 7
    %v950 = vsub.s32 3, %v949
    %v951 = vrot.slane %v934, %v950
    %v956 = vadd.f32 %v926, %v939
    %v957 = vadd.f32 %v927, %v943
    %v958 = vadd.f32 %v928, %v947
    %v959 = vadd.f32 %v929, %v951
    %v960 = vadd.f32 %v930, %v939
    %v961 = vadd.f32 %v931, %v943
    %v962 = vadd.f32 %v932, %v947
    %v963 = vadd.f32 %v933, %v951
    %vm964 = vcmp.gt.f32.partialorder %v956, 0.0
    %vm965 = vcmp.gt.f32.partialorder %v957, 0.0
    %vm966 = vcmp.gt.f32.partialorder %v958, 0.0
    %vm967 = vcmp.gt.f32.partialorder %v959, 0.0
    %vm968 = vcmp.gt.f32.partialorder %v960, 0.0
    %vm969 = vcmp.gt.f32.partialorder %v961, 0.0
    %vm970 = vcmp.gt.f32.partialorder %v962, 0.0
    %vm971 = vcmp.gt.f32.partialorder %v963, 0.0
    %v972 = vmul.f32 %v956, 0.2
    %v973 = vmul.f32 %v957, 0.2
    %v974 = vmul.f32 %v958, 0.2
    %v975 = vmul.f32 %v959, 0.2
    %v976 = vmul.f32 %v960, 0.2
    %v977 = vmul.f32 %v961, 0.2
    %v978 = vmul.f32 %v962, 0.2
    %v979 = vmul.f32 %v963, 0.2
    %v980 = vsel %vm964, %v956, %v972
    %v981 = vsel %vm965, %v957, %v973
    %v982 = vsel %vm966, %v958, %v974
    %v983 = vsel %vm967, %v959, %v975
    %v984 = vsel %vm968, %v960, %v976
    %v985 = vsel %vm969, %v961, %v977
    %v986 = vsel %vm970, %v962, %v978
    %v987 = vsel %vm971, %v963, %v979
    %s988 = smul.u32 2, 64
    %s989 = smul.u32 %s988, 4
    %s990 = sshll.u32 %s989, 4
    %991 = dma.done [#allocation4], %s990
    %v992 = vld [vmem:[#allocation2] sm:$0xff]
    %v993 = vld [vmem:[#allocation2 + $0x8] sm:$0xff]
    %v994 = vld [vmem:[#allocation2 + $0x10] sm:$0xff]
    %v995 = vld [vmem:[#allocation2 + $0x18] sm:$0xff]
    %v996 = vld [vmem:[#allocation2 + $0x20] sm:$0xff]
    %v997 = vld [vmem:[#allocation2 + $0x28] sm:$0xff]
    %v998 = vld [vmem:[#allocation2 + $0x30] sm:$0xff]
    %v999 = vld [vmem:[#allocation2 + $0x38] sm:$0xff]
    %v1000 = vld [vmem:[#allocation2 + $0x40] sm:$0xff]
    %v1001 = vld [vmem:[#allocation2 + $0x48] sm:$0xff]
    %v1002 = vld [vmem:[#allocation2 + $0x50] sm:$0xff]
    %v1003 = vld [vmem:[#allocation2 + $0x58] sm:$0xff]
    %v1004 = vld [vmem:[#allocation2 + $0x60] sm:$0xff]
    %v1005 = vld [vmem:[#allocation2 + $0x68] sm:$0xff]
    %v1006 = vld [vmem:[#allocation2 + $0x70] sm:$0xff]
    %v1007 = vld [vmem:[#allocation2 + $0x78] sm:$0xff]
    %v1008 = vld [vmem:[#allocation2 + $0x80] sm:$0xff]
    %v1009 = vld [vmem:[#allocation2 + $0x88] sm:$0xff]
    %v1010 = vld [vmem:[#allocation2 + $0x90] sm:$0xff]
    %v1011 = vld [vmem:[#allocation2 + $0x98] sm:$0xff]
    %v1012 = vld [vmem:[#allocation2 + $0xa0] sm:$0xff]
    %v1013 = vld [vmem:[#allocation2 + $0xa8] sm:$0xff]
    %v1014 = vld [vmem:[#allocation2 + $0xb0] sm:$0xff]
    %v1015 = vld [vmem:[#allocation2 + $0xb8] sm:$0xff]
    %v1016 = vld [vmem:[#allocation2 + $0xc0] sm:$0xff]
    %v1017 = vld [vmem:[#allocation2 + $0xc8] sm:$0xff]
    %v1018 = vld [vmem:[#allocation2 + $0xd0] sm:$0xff]
    %v1019 = vld [vmem:[#allocation2 + $0xd8] sm:$0xff]
    %v1020 = vld [vmem:[#allocation2 + $0xe0] sm:$0xff]
    %v1021 = vld [vmem:[#allocation2 + $0xe8] sm:$0xff]
    %v1022 = vld [vmem:[#allocation2 + $0xf0] sm:$0xff]
    %v1023 = vld [vmem:[#allocation2 + $0xf8] sm:$0xff]
    %v1024 = vld [vmem:[#allocation2 + $0x100] sm:$0xff]
    %v1025 = vld [vmem:[#allocation2 + $0x108] sm:$0xff]
    %v1026 = vld [vmem:[#allocation2 + $0x110] sm:$0xff]
    %v1027 = vld [vmem:[#allocation2 + $0x118] sm:$0xff]
    %v1028 = vld [vmem:[#allocation2 + $0x120] sm:$0xff]
    %v1029 = vld [vmem:[#allocation2 + $0x128] sm:$0xff]
    %v1030 = vld [vmem:[#allocation2 + $0x130] sm:$0xff]
    %v1031 = vld [vmem:[#allocation2 + $0x138] sm:$0xff]
    %v1032 = vld [vmem:[#allocation2 + $0x140] sm:$0xff]
    %v1033 = vld [vmem:[#allocation2 + $0x148] sm:$0xff]
    %v1034 = vld [vmem:[#allocation2 + $0x150] sm:$0xff]
    %v1035 = vld [vmem:[#allocation2 + $0x158] sm:$0xff]
    %v1036 = vld [vmem:[#allocation2 + $0x160] sm:$0xff]
    %v1037 = vld [vmem:[#allocation2 + $0x168] sm:$0xff]
    %v1038 = vld [vmem:[#allocation2 + $0x170] sm:$0xff]
    %v1039 = vld [vmem:[#allocation2 + $0x178] sm:$0xff]
    %v1040 = vld [vmem:[#allocation2 + $0x180] sm:$0xff]
    %v1041 = vld [vmem:[#allocation2 + $0x188] sm:$0xff]
    %v1042 = vld [vmem:[#allocation2 + $0x190] sm:$0xff]
    %v1043 = vld [vmem:[#allocation2 + $0x198] sm:$0xff]
    %v1044 = vld [vmem:[#allocation2 + $0x1a0] sm:$0xff]
    %v1045 = vld [vmem:[#allocation2 + $0x1a8] sm:$0xff]
    %v1046 = vld [vmem:[#allocation2 + $0x1b0] sm:$0xff]
    %v1047 = vld [vmem:[#allocation2 + $0x1b8] sm:$0xff]
    %v1048 = vld [vmem:[#allocation2 + $0x1c0] sm:$0xff]
    %v1049 = vld [vmem:[#allocation2 + $0x1c8] sm:$0xff]
    %v1050 = vld [vmem:[#allocation2 + $0x1d0] sm:$0xff]
    %v1051 = vld [vmem:[#allocation2 + $0x1d8] sm:$0xff]
    %v1052 = vld [vmem:[#allocation2 + $0x1e0] sm:$0xff]
    %v1053 = vld [vmem:[#allocation2 + $0x1e8] sm:$0xff]
    %v1054 = vld [vmem:[#allocation2 + $0x1f0] sm:$0xff]
    %v1055 = vld [vmem:[#allocation2 + $0x1f8] sm:$0xff]
    %v1056 = vunpack.c.l.s8.bf16 %v992
    %v1057 = vunpack.c.l.s8.bf16 %v993
    %v1058 = vunpack.c.l.s8.bf16 %v994
    %v1059 = vunpack.c.l.s8.bf16 %v995
    %v1060 = vunpack.c.h.s8.bf16 %v992
    %v1061 = vunpack.c.h.s8.bf16 %v993
    %v1062 = vunpack.c.h.s8.bf16 %v994
    %v1063 = vunpack.c.h.s8.bf16 %v995
    %v1064 = vunpack.c.l.s8.bf16 %v996
    %v1065 = vunpack.c.l.s8.bf16 %v997
    %v1066 = vunpack.c.l.s8.bf16 %v998
    %v1067 = vunpack.c.l.s8.bf16 %v999
    %v1068 = vunpack.c.h.s8.bf16 %v996
    %v1069 = vunpack.c.h.s8.bf16 %v997
    %v1070 = vunpack.c.h.s8.bf16 %v998
    %v1071 = vunpack.c.h.s8.bf16 %v999
    %v1072 = vunpack.c.l.s8.bf16 %v1000
    %v1073 = vunpack.c.l.s8.bf16 %v1001
    %v1074 = vunpack.c.l.s8.bf16 %v1002
    %v1075 = vunpack.c.l.s8.bf16 %v1003
    %v1076 = vunpack.c.h.s8.bf16 %v1000
    %v1077 = vunpack.c.h.s8.bf16 %v1001
    %v1078 = vunpack.c.h.s8.bf16 %v1002
    %v1079 = vunpack.c.h.s8.bf16 %v1003
    %v1080 = vunpack.c.l.s8.bf16 %v1004
    %v1081 = vunpack.c.l.s8.bf16 %v1005
    %v1082 = vunpack.c.l.s8.bf16 %v1006
    %v1083 = vunpack.c.l.s8.bf16 %v1007
    %v1084 = vunpack.c.h.s8.bf16 %v1004
    %v1085 = vunpack.c.h.s8.bf16 %v1005
    %v1086 = vunpack.c.h.s8.bf16 %v1006
    %v1087 = vunpack.c.h.s8.bf16 %v1007
    %v1088 = vunpack.c.l.s8.bf16 %v1008
    %v1089 = vunpack.c.l.s8.bf16 %v1009
    %v1090 = vunpack.c.l.s8.bf16 %v1010
    %v1091 = vunpack.c.l.s8.bf16 %v1011
    %v1092 = vunpack.c.h.s8.bf16 %v1008
    %v1093 = vunpack.c.h.s8.bf16 %v1009
    %v1094 = vunpack.c.h.s8.bf16 %v1010
    %v1095 = vunpack.c.h.s8.bf16 %v1011
    %v1096 = vunpack.c.l.s8.bf16 %v1012
    %v1097 = vunpack.c.l.s8.bf16 %v1013
    %v1098 = vunpack.c.l.s8.bf16 %v1014
    %v1099 = vunpack.c.l.s8.bf16 %v1015
    %v1100 = vunpack.c.h.s8.bf16 %v1012
    %v1101 = vunpack.c.h.s8.bf16 %v1013
    %v1102 = vunpack.c.h.s8.bf16 %v1014
    %v1103 = vunpack.c.h.s8.bf16 %v1015
    %v1104 = vunpack.c.l.s8.bf16 %v1016
    %v1105 = vunpack.c.l.s8.bf16 %v1017
    %v1106 = vunpack.c.l.s8.bf16 %v1018
    %v1107 = vunpack.c.l.s8.bf16 %v1019
    %v1108 = vunpack.c.h.s8.bf16 %v1016
    %v1109 = vunpack.c.h.s8.bf16 %v1017
    %v1110 = vunpack.c.h.s8.bf16 %v1018
    %v1111 = vunpack.c.h.s8.bf16 %v1019
    %v1112 = vunpack.c.l.s8.bf16 %v1020
    %v1113 = vunpack.c.l.s8.bf16 %v1021
    %v1114 = vunpack.c.l.s8.bf16 %v1022
    %v1115 = vunpack.c.l.s8.bf16 %v1023
    %v1116 = vunpack.c.h.s8.bf16 %v1020
    %v1117 = vunpack.c.h.s8.bf16 %v1021
    %v1118 = vunpack.c.h.s8.bf16 %v1022
    %v1119 = vunpack.c.h.s8.bf16 %v1023
    %v1120 = vunpack.c.l.s8.bf16 %v1024
    %v1121 = vunpack.c.l.s8.bf16 %v1025
    %v1122 = vunpack.c.l.s8.bf16 %v1026
    %v1123 = vunpack.c.l.s8.bf16 %v1027
    %v1124 = vunpack.c.h.s8.bf16 %v1024
    %v1125 = vunpack.c.h.s8.bf16 %v1025
    %v1126 = vunpack.c.h.s8.bf16 %v1026
    %v1127 = vunpack.c.h.s8.bf16 %v1027
    %v1128 = vunpack.c.l.s8.bf16 %v1028
    %v1129 = vunpack.c.l.s8.bf16 %v1029
    %v1130 = vunpack.c.l.s8.bf16 %v1030
    %v1131 = vunpack.c.l.s8.bf16 %v1031
    %v1132 = vunpack.c.h.s8.bf16 %v1028
    %v1133 = vunpack.c.h.s8.bf16 %v1029
    %v1134 = vunpack.c.h.s8.bf16 %v1030
    %v1135 = vunpack.c.h.s8.bf16 %v1031
    %v1136 = vunpack.c.l.s8.bf16 %v1032
    %v1137 = vunpack.c.l.s8.bf16 %v1033
    %v1138 = vunpack.c.l.s8.bf16 %v1034
    %v1139 = vunpack.c.l.s8.bf16 %v1035
    %v1140 = vunpack.c.h.s8.bf16 %v1032
    %v1141 = vunpack.c.h.s8.bf16 %v1033
    %v1142 = vunpack.c.h.s8.bf16 %v1034
    %v1143 = vunpack.c.h.s8.bf16 %v1035
    %v1144 = vunpack.c.l.s8.bf16 %v1036
    %v1145 = vunpack.c.l.s8.bf16 %v1037
    %v1146 = vunpack.c.l.s8.bf16 %v1038
    %v1147 = vunpack.c.l.s8.bf16 %v1039
    %v1148 = vunpack.c.h.s8.bf16 %v1036
    %v1149 = vunpack.c.h.s8.bf16 %v1037
    %v1150 = vunpack.c.h.s8.bf16 %v1038
    %v1151 = vunpack.c.h.s8.bf16 %v1039
    %v1152 = vunpack.c.l.s8.bf16 %v1040
    %v1153 = vunpack.c.l.s8.bf16 %v1041
    %v1154 = vunpack.c.l.s8.bf16 %v1042
    %v1155 = vunpack.c.l.s8.bf16 %v1043
    %v1156 = vunpack.c.h.s8.bf16 %v1040
    %v1157 = vunpack.c.h.s8.bf16 %v1041
    %v1158 = vunpack.c.h.s8.bf16 %v1042
    %v1159 = vunpack.c.h.s8.bf16 %v1043
    %v1160 = vunpack.c.l.s8.bf16 %v1044
    %v1161 = vunpack.c.l.s8.bf16 %v1045
    %v1162 = vunpack.c.l.s8.bf16 %v1046
    %v1163 = vunpack.c.l.s8.bf16 %v1047
    %v1164 = vunpack.c.h.s8.bf16 %v1044
    %v1165 = vunpack.c.h.s8.bf16 %v1045
    %v1166 = vunpack.c.h.s8.bf16 %v1046
    %v1167 = vunpack.c.h.s8.bf16 %v1047
    %v1168 = vunpack.c.l.s8.bf16 %v1048
    %v1169 = vunpack.c.l.s8.bf16 %v1049
    %v1170 = vunpack.c.l.s8.bf16 %v1050
    %v1171 = vunpack.c.l.s8.bf16 %v1051
    %v1172 = vunpack.c.h.s8.bf16 %v1048
    %v1173 = vunpack.c.h.s8.bf16 %v1049
    %v1174 = vunpack.c.h.s8.bf16 %v1050
    %v1175 = vunpack.c.h.s8.bf16 %v1051
    %v1176 = vunpack.c.l.s8.bf16 %v1052
    %v1177 = vunpack.c.l.s8.bf16 %v1053
    %v1178 = vunpack.c.l.s8.bf16 %v1054
    %v1179 = vunpack.c.l.s8.bf16 %v1055
    %v1180 = vunpack.c.h.s8.bf16 %v1052
    %v1181 = vunpack.c.h.s8.bf16 %v1053
    %v1182 = vunpack.c.h.s8.bf16 %v1054
    %v1183 = vunpack.c.h.s8.bf16 %v1055
    %v1184 = vpack.c.bf16 %v984, %v980
    %v1185 = vpack.c.bf16 %v985, %v981
    %v1186 = vpack.c.bf16 %v986, %v982
    %v1187 = vpack.c.bf16 %v987, %v983
    %1188 = vmatprep.subr.bf16.mxu0 %v1057
    %1189 = vmatpush1.bf16.msra.mxu0 %v1056
    %1190 = vmatprep.subr.bf16.mxu0 %v1061
    %1191 = vmatpush1.bf16.msra.mxu0 %v1060
    %1192 = vmatprep.subr.bf16.mxu0 %v1065
    %1193 = vmatpush1.bf16.msra.mxu0 %v1064
    %1194 = vmatprep.subr.bf16.mxu0 %v1069
    %1195 = vmatpush1.bf16.msra.mxu0 %v1068
    %1196 = vmatprep.subr.bf16.mxu0 %v1073
    %1197 = vmatpush1.bf16.msra.mxu0 %v1072
    %1198 = vmatprep.subr.bf16.mxu0 %v1077
    %1199 = vmatpush1.bf16.msra.mxu0 %v1076
    %1200 = vmatprep.subr.bf16.mxu0 %v1081
    %1201 = vmatpush1.bf16.msra.mxu0 %v1080
    %1202 = vmatprep.subr.bf16.mxu0 %v1085
    %1203 = vmatpush1.bf16.msra.mxu0 %v1084
    %1204 = vmatprep.subr.bf16.mxu0 %v1089
    %1205 = vmatpush1.bf16.msra.mxu0 %v1088
    %1206 = vmatprep.subr.bf16.mxu0 %v1093
    %1207 = vmatpush1.bf16.msra.mxu0 %v1092
    %1208 = vmatprep.subr.bf16.mxu0 %v1097
    %1209 = vmatpush1.bf16.msra.mxu0 %v1096
    %1210 = vmatprep.subr.bf16.mxu0 %v1101
    %1211 = vmatpush1.bf16.msra.mxu0 %v1100
    %1212 = vmatprep.subr.bf16.mxu0 %v1105
    %1213 = vmatpush1.bf16.msra.mxu0 %v1104
    %1214 = vmatprep.subr.bf16.mxu0 %v1109
    %1215 = vmatpush1.bf16.msra.mxu0 %v1108
    %1216 = vmatprep.subr.bf16.mxu0 %v1113
    %1217 = vmatpush1.bf16.msra.mxu0 %v1112
    %1218 = vmatprep.subr.bf16.mxu0 %v1117
    %1219 = vmatpush1.bf16.msra.mxu0 %v1116
    %1220 = vmatprep.mubr.bf16.mxu0 %v1185
    %1221 = vmatmul.mubr.bf16.gmra.mrb[0].mxu0 %v1184
    %v1222 = vpop.f32.mrb[0].mxu0
    %v1223 = vadd.f32 0.0, %v1222
    %v1224 = vpop.f32.mrb[0].mxu0
    %v1225 = vadd.f32 0.0, %v1224
    %v1226 = vpop.f32.mrb[0].mxu0
    %v1227 = vadd.f32 0.0, %v1226
    %v1228 = vpop.f32.mrb[0].mxu0
    %v1229 = vadd.f32 0.0, %v1228
    %1230 = vdwg.mxu0
    %1231 = vmatprep.subr.bf16.mxu0 %v1121
    %1232 = vmatpush1.bf16.msra.mxu0 %v1120
    %1233 = vmatprep.subr.bf16.mxu0 %v1125
    %1234 = vmatpush1.bf16.msra.mxu0 %v1124
    %1235 = vmatprep.subr.bf16.mxu0 %v1129
    %1236 = vmatpush1.bf16.msra.mxu0 %v1128
    %1237 = vmatprep.subr.bf16.mxu0 %v1133
    %1238 = vmatpush1.bf16.msra.mxu0 %v1132
    %1239 = vmatprep.subr.bf16.mxu0 %v1137
    %1240 = vmatpush1.bf16.msra.mxu0 %v1136
    %1241 = vmatprep.subr.bf16.mxu0 %v1141
    %1242 = vmatpush1.bf16.msra.mxu0 %v1140
    %1243 = vmatprep.subr.bf16.mxu0 %v1145
    %1244 = vmatpush1.bf16.msra.mxu0 %v1144
    %1245 = vmatprep.subr.bf16.mxu0 %v1149
    %1246 = vmatpush1.bf16.msra.mxu0 %v1148
    %1247 = vmatprep.subr.bf16.mxu0 %v1153
    %1248 = vmatpush1.bf16.msra.mxu0 %v1152
    %1249 = vmatprep.subr.bf16.mxu0 %v1157
    %1250 = vmatpush1.bf16.msra.mxu0 %v1156
    %1251 = vmatprep.subr.bf16.mxu0 %v1161
    %1252 = vmatpush1.bf16.msra.mxu0 %v1160
    %1253 = vmatprep.subr.bf16.mxu0 %v1165
    %1254 = vmatpush1.bf16.msra.mxu0 %v1164
    %1255 = vmatprep.subr.bf16.mxu0 %v1169
    %1256 = vmatpush1.bf16.msra.mxu0 %v1168
    %1257 = vmatprep.subr.bf16.mxu0 %v1173
    %1258 = vmatpush1.bf16.msra.mxu0 %v1172
    %1259 = vmatprep.subr.bf16.mxu0 %v1177
    %1260 = vmatpush1.bf16.msra.mxu0 %v1176
    %1261 = vmatprep.subr.bf16.mxu0 %v1181
    %1262 = vmatpush1.bf16.msra.mxu0 %v1180
    %1263 = vmatprep.mubr.bf16.mxu0 %v1187
    %1264 = vmatmul.mubr.bf16.gmra.mrb[0].mxu0 %v1186
    %v1265 = vpop.f32.mrb[0].mxu0
    %v1266 = vadd.f32 %v1223, %v1265
    %v1267 = vpop.f32.mrb[0].mxu0
    %v1268 = vadd.f32 %v1225, %v1267
    %v1269 = vpop.f32.mrb[0].mxu0
    %v1270 = vadd.f32 %v1227, %v1269
    %v1271 = vpop.f32.mrb[0].mxu0
    %v1272 = vadd.f32 %v1229, %v1271
    %1273 = vdwg.mxu0
    %1274 = vmatprep.subr.bf16.mxu0 %v1059
    %1275 = vmatpush1.bf16.msra.mxu0 %v1058
    %1276 = vmatprep.subr.bf16.mxu0 %v1063
    %1277 = vmatpush1.bf16.msra.mxu0 %v1062
    %1278 = vmatprep.subr.bf16.mxu0 %v1067
    %1279 = vmatpush1.bf16.msra.mxu0 %v1066
    %1280 = vmatprep.subr.bf16.mxu0 %v1071
    %1281 = vmatpush1.bf16.msra.mxu0 %v1070
    %1282 = vmatprep.subr.bf16.mxu0 %v1075
    %1283 = vmatpush1.bf16.msra.mxu0 %v1074
    %1284 = vmatprep.subr.bf16.mxu0 %v1079
    %1285 = vmatpush1.bf16.msra.mxu0 %v1078
    %1286 = vmatprep.subr.bf16.mxu0 %v1083
    %1287 = vmatpush1.bf16.msra.mxu0 %v1082
    %1288 = vmatprep.subr.bf16.mxu0 %v1087
    %1289 = vmatpush1.bf16.msra.mxu0 %v1086
    %1290 = vmatprep.subr.bf16.mxu0 %v1091
    %1291 = vmatpush1.bf16.msra.mxu0 %v1090
    %1292 = vmatprep.subr.bf16.mxu0 %v1095
    %1293 = vmatpush1.bf16.msra.mxu0 %v1094
    %1294 = vmatprep.subr.bf16.mxu0 %v1099
    %1295 = vmatpush1.bf16.msra.mxu0 %v1098
    %1296 = vmatprep.subr.bf16.mxu0 %v1103
    %1297 = vmatpush1.bf16.msra.mxu0 %v1102
    %1298 = vmatprep.subr.bf16.mxu0 %v1107
    %1299 = vmatpush1.bf16.msra.mxu0 %v1106
    %1300 = vmatprep.subr.bf16.mxu0 %v1111
    %1301 = vmatpush1.bf16.msra.mxu0 %v1110
    %1302 = vmatprep.subr.bf16.mxu0 %v1115
    %1303 = vmatpush1.bf16.msra.mxu0 %v1114
    %1304 = vmatprep.subr.bf16.mxu0 %v1119
    %1305 = vmatpush1.bf16.msra.mxu0 %v1118
    %1306 = vmatprep.mubr.bf16.mxu0 %v1185
    %1307 = vmatmul.mubr.bf16.gmra.mrb[0].mxu0 %v1184
    %v1308 = vpop.f32.mrb[0].mxu0
    %v1309 = vadd.f32 0.0, %v1308
    %v1310 = vpop.f32.mrb[0].mxu0
    %v1311 = vadd.f32 0.0, %v1310
    %v1312 = vpop.f32.mrb[0].mxu0
    %v1313 = vadd.f32 0.0, %v1312
    %v1314 = vpop.f32.mrb[0].mxu0
    %v1315 = vadd.f32 0.0, %v1314
    %1316 = vdwg.mxu0
    %1317 = vmatprep.subr.bf16.mxu0 %v1123
    %1318 = vmatpush1.bf16.msra.mxu0 %v1122
    %1319 = vmatprep.subr.bf16.mxu0 %v1127
    %1320 = vmatpush1.bf16.msra.mxu0 %v1126
    %1321 = vmatprep.subr.bf16.mxu0 %v1131
    %1322 = vmatpush1.bf16.msra.mxu0 %v1130
    %1323 = vmatprep.subr.bf16.mxu0 %v1135
    %1324 = vmatpush1.bf16.msra.mxu0 %v1134
    %1325 = vmatprep.subr.bf16.mxu0 %v1139
    %1326 = vmatpush1.bf16.msra.mxu0 %v1138
    %1327 = vmatprep.subr.bf16.mxu0 %v1143
    %1328 = vmatpush1.bf16.msra.mxu0 %v1142
    %1329 = vmatprep.subr.bf16.mxu0 %v1147
    %1330 = vmatpush1.bf16.msra.mxu0 %v1146
    %1331 = vmatprep.subr.bf16.mxu0 %v1151
    %1332 = vmatpush1.bf16.msra.mxu0 %v1150
    %1333 = vmatprep.subr.bf16.mxu0 %v1155
    %1334 = vmatpush1.bf16.msra.mxu0 %v1154
    %1335 = vmatprep.subr.bf16.mxu0 %v1159
    %1336 = vmatpush1.bf16.msra.mxu0 %v1158
    %1337 = vmatprep.subr.bf16.mxu0 %v1163
    %1338 = vmatpush1.bf16.msra.mxu0 %v1162
    %1339 = vmatprep.subr.bf16.mxu0 %v1167
    %1340 = vmatpush1.bf16.msra.mxu0 %v1166
    %1341 = vmatprep.subr.bf16.mxu0 %v1171
    %1342 = vmatpush1.bf16.msra.mxu0 %v1170
    %1343 = vmatprep.subr.bf16.mxu0 %v1175
    %1344 = vmatpush1.bf16.msra.mxu0 %v1174
    %1345 = vmatprep.subr.bf16.mxu0 %v1179
    %1346 = vmatpush1.bf16.msra.mxu0 %v1178
    %1347 = vmatprep.subr.bf16.mxu0 %v1183
    %1348 = vmatpush1.bf16.msra.mxu0 %v1182
    %1349 = vmatprep.mubr.bf16.mxu0 %v1187
    %1350 = vmatmul.mubr.bf16.gmra.mrb[0].mxu0 %v1186
    %v1351 = vpop.f32.mrb[0].mxu0
    %v1352 = vadd.f32 %v1309, %v1351
    %v1353 = vpop.f32.mrb[0].mxu0
    %v1354 = vadd.f32 %v1311, %v1353
    %v1355 = vpop.f32.mrb[0].mxu0
    %v1356 = vadd.f32 %v1313, %v1355
    %v1357 = vpop.f32.mrb[0].mxu0
    %v1358 = vadd.f32 %v1315, %v1357
    %1359 = vdwg.mxu0
    %s1360 = scalar_lea.vmem %s2, 3
    %v1361 = vld [vmem:[%s1360] ss:$8 sm:$0xf]
    %v1363 = vlaneseq
    %v1364 = vshrl.u32 %v1363, 7
    %v1365 = vsub.s32 0, %v1364
    %v1366 = vrot.slane %v1361, %v1365
    %v1367 = vlaneseq
    %v1368 = vshrl.u32 %v1367, 7
    %v1369 = vsub.s32 1, %v1368
    %v1370 = vrot.slane %v1361, %v1369
    %v1371 = vlaneseq
    %v1372 = vshrl.u32 %v1371, 7
    %v1373 = vsub.s32 2, %v1372
    %v1374 = vrot.slane %v1361, %v1373
    %v1375 = vlaneseq
    %v1376 = vshrl.u32 %v1375, 7
    %v1377 = vsub.s32 3, %v1376
    %v1378 = vrot.slane %v1361, %v1377
    %v1383 = vmul.f32 %v1266, %v1366
    %v1384 = vmul.f32 %v1268, %v1370
    %v1385 = vmul.f32 %v1352, %v1374
    %v1386 = vmul.f32 %v1354, %v1378
    %v1387 = vmul.f32 %v1270, %v1366
    %v1388 = vmul.f32 %v1272, %v1370
    %v1389 = vmul.f32 %v1356, %v1374
    %v1390 = vmul.f32 %v1358, %v1378
    %s1391 = scalar_lea.vmem %s2, 2
    %v1392 = vld [vmem:[%s1391] ss:$8 sm:$0xf]
    %v1394 = vlaneseq
    %v1395 = vshrl.u32 %v1394, 7
    %v1396 = vsub.s32 0, %v1395
    %v1397 = vrot.slane %v1392, %v1396
    %v1398 = vlaneseq
    %v1399 = vshrl.u32 %v1398, 7
    %v1400 = vsub.s32 1, %v1399
    %v1401 = vrot.slane %v1392, %v1400
    %v1402 = vlaneseq
    %v1403 = vshrl.u32 %v1402, 7
    %v1404 = vsub.s32 2, %v1403
    %v1405 = vrot.slane %v1392, %v1404
    %v1406 = vlaneseq
    %v1407 = vshrl.u32 %v1406, 7
    %v1408 = vsub.s32 3, %v1407
    %v1409 = vrot.slane %v1392, %v1408
    %v1414 = vadd.f32 %v1383, %v1397
    %v1415 = vadd.f32 %v1384, %v1401
    %v1416 = vadd.f32 %v1385, %v1405
    %v1417 = vadd.f32 %v1386, %v1409
    %v1418 = vadd.f32 %v1387, %v1397
    %v1419 = vadd.f32 %v1388, %v1401
    %v1420 = vadd.f32 %v1389, %v1405
    %v1421 = vadd.f32 %v1390, %v1409
    %v1422 = vadd.f32 %v1414, %v1418
    %v1423 = vrot.slane %v1422, 4
    %v1424 = vadd.f32 %v1422, %v1423
    %v1425 = vrot.slane %v1424, 2
    %v1426 = vadd.f32 %v1424, %v1425
    %v1427 = vrot.slane %v1426, 1
    %v1428 = vadd.f32 %v1426, %v1427
    %v1429 = vadd.f32 %v1415, %v1419
    %v1430 = vrot.slane %v1429, 4
    %v1431 = vadd.f32 %v1429, %v1430
    %v1432 = vrot.slane %v1431, 2
    %v1433 = vadd.f32 %v1431, %v1432
    %v1434 = vrot.slane %v1433, 1
    %v1435 = vadd.f32 %v1433, %v1434
    %v1436 = vadd.f32 %v1416, %v1420
    %v1437 = vrot.slane %v1436, 4
    %v1438 = vadd.f32 %v1436, %v1437
    %v1439 = vrot.slane %v1438, 2
    %v1440 = vadd.f32 %v1438, %v1439
    %v1441 = vrot.slane %v1440, 1
    %v1442 = vadd.f32 %v1440, %v1441
    %v1443 = vadd.f32 %v1417, %v1421
    %v1444 = vrot.slane %v1443, 4
    %v1445 = vadd.f32 %v1443, %v1444
    %v1446 = vrot.slane %v1445, 2
    %v1447 = vadd.f32 %v1445, %v1446
    %v1448 = vrot.slane %v1447, 1
    %v1449 = vadd.f32 %v1447, %v1448
    %v1450 = vrcp.pop 16.0
    %v1451 = vmul.f32 %v1428, %v1450
    %v1452 = vmul.f32 %v1435, %v1450
    %v1453 = vmul.f32 %v1442, %v1450
    %v1454 = vmul.f32 %v1449, %v1450
    %v1455 = vmul.f32 %v1414, %v1414
    %v1456 = vmul.f32 %v1415, %v1415
    %v1457 = vmul.f32 %v1416, %v1416
    %v1458 = vmul.f32 %v1417, %v1417
    %v1459 = vmul.f32 %v1418, %v1418
    %v1460 = vmul.f32 %v1419, %v1419
    %v1461 = vmul.f32 %v1420, %v1420
    %v1462 = vmul.f32 %v1421, %v1421
    %v1463 = vadd.f32 %v1455, %v1459
    %v1464 = vrot.slane %v1463, 4
    %v1465 = vadd.f32 %v1463, %v1464
    %v1466 = vrot.slane %v1465, 2
    %v1467 = vadd.f32 %v1465, %v1466
    %v1468 = vrot.slane %v1467, 1
    %v1469 = vadd.f32 %v1467, %v1468
    %v1470 = vadd.f32 %v1456, %v1460
    %v1471 = vrot.slane %v1470, 4
    %v1472 = vadd.f32 %v1470, %v1471
    %v1473 = vrot.slane %v1472, 2
    %v1474 = vadd.f32 %v1472, %v1473
    %v1475 = vrot.slane %v1474, 1
    %v1476 = vadd.f32 %v1474, %v1475
    %v1477 = vadd.f32 %v1457, %v1461
    %v1478 = vrot.slane %v1477, 4
    %v1479 = vadd.f32 %v1477, %v1478
    %v1480 = vrot.slane %v1479, 2
    %v1481 = vadd.f32 %v1479, %v1480
    %v1482 = vrot.slane %v1481, 1
    %v1483 = vadd.f32 %v1481, %v1482
    %v1484 = vadd.f32 %v1458, %v1462
    %v1485 = vrot.slane %v1484, 4
    %v1486 = vadd.f32 %v1484, %v1485
    %v1487 = vrot.slane %v1486, 2
    %v1488 = vadd.f32 %v1486, %v1487
    %v1489 = vrot.slane %v1488, 1
    %v1490 = vadd.f32 %v1488, %v1489
    %v1491 = vmul.f32 %v1469, %v1450
    %v1492 = vmul.f32 %v1476, %v1450
    %v1493 = vmul.f32 %v1483, %v1450
    %v1494 = vmul.f32 %v1490, %v1450
    %v1495 = vmul.f32 %v1451, %v1451
    %v1496 = vmul.f32 %v1452, %v1452
    %v1497 = vmul.f32 %v1453, %v1453
    %v1498 = vmul.f32 %v1454, %v1454
    %v1499 = vsub.f32 %v1491, %v1495
    %v1500 = vsub.f32 %v1492, %v1496
    %v1501 = vsub.f32 %v1493, %v1497
    %v1502 = vsub.f32 %v1494, %v1498
    %v1503 = vmax.f32 %v1499, 0.0
    %v1504 = vmax.f32 %v1500, 0.0
    %v1505 = vmax.f32 %v1501, 0.0
    %v1506 = vmax.f32 %v1502, 0.0
    %s1507 = scalar_lea.vmem %s2, 4
    %v1508 = vld [vmem:[%s1507] ss:$8 sm:$0xf]
    %v1509 = vadd.f32 %v1503, 1e-05
    %v1510 = vadd.f32 %v1504, 1e-05
    %v1511 = vadd.f32 %v1505, 1e-05
    %v1512 = vadd.f32 %v1506, 1e-05
    %v1513 = vrsqrt.pop %v1509
    %v1514 = vrsqrt.pop %v1510
    %v1515 = vrsqrt.pop %v1511
    %v1516 = vrsqrt.pop %v1512
    %v1521 = vcombine.low %v1513, %v1514
    %v1522 = vcombine.low %v1515, %v1516
    %v1524 = vunpack.c.l.s4 1966171168
    %v1525 = vunpack.c.0.s8 %v1524
    %v1526 = vlaneseq
    %v1527 = vshrl.u32 %v1526, 7
    %v1528 = vsub.s32 %v1525, %v1527
    %v1529 = vrot.slane %v1521, %v1528
    %v1531 = vunpack.c.l.s4 1966171168
    %v1532 = vunpack.c.0.s8 %v1531
    %v1533 = vlaneseq
    %v1534 = vshrl.u32 %v1533, 7
    %v1535 = vsub.s32 %v1532, %v1534
    %v1536 = vrot.slane %v1522, %v1535
    %v1537 = vcombine.low %v1529, %v1536
    %v1539 = vunpack.c.l.s4 1966171168
    %v1540 = vunpack.c.0.s8 %v1539
    %v1541 = vlaneseq
    %v1542 = vshrl.u32 %v1541, 7
    %v1543 = vsub.s32 %v1540, %v1542
    %v1544 = vrot.slane %v1537, %v1543
    %v1546 = vmul.f32 %v1508, %v1544
    %s1547 = scalar_lea.vmem %s2, 5
    %v1548 = vld [vmem:[%s1547] ss:$8 sm:$0xf]
    %v1550 = vlaneseq
    %v1551 = vshrl.u32 %v1550, 7
    %v1552 = vsub.s32 0, %v1551
    %v1553 = vrot.slane %v1546, %v1552
    %v1554 = vlaneseq
    %v1555 = vshrl.u32 %v1554, 7
    %v1556 = vsub.s32 1, %v1555
    %v1557 = vrot.slane %v1546, %v1556
    %v1558 = vlaneseq
    %v1559 = vshrl.u32 %v1558, 7
    %v1560 = vsub.s32 2, %v1559
    %v1561 = vrot.slane %v1546, %v1560
    %v1562 = vlaneseq
    %v1563 = vshrl.u32 %v1562, 7
    %v1564 = vsub.s32 3, %v1563
    %v1565 = vrot.slane %v1546, %v1564
    %v1570 = vmul.f32 %v1451, %v1553
    %v1571 = vmul.f32 %v1452, %v1557
    %v1572 = vmul.f32 %v1453, %v1561
    %v1573 = vmul.f32 %v1454, %v1565
    %v1578 = vcombine.low %v1570, %v1571
    %v1579 = vcombine.low %v1572, %v1573
    %v1581 = vunpack.c.l.s4 1966171168
    %v1582 = vunpack.c.0.s8 %v1581
    %v1583 = vlaneseq
    %v1584 = vshrl.u32 %v1583, 7
    %v1585 = vsub.s32 %v1582, %v1584
    %v1586 = vrot.slane %v1578, %v1585
    %v1588 = vunpack.c.l.s4 1966171168
    %v1589 = vunpack.c.0.s8 %v1588
    %v1590 = vlaneseq
    %v1591 = vshrl.u32 %v1590, 7
    %v1592 = vsub.s32 %v1589, %v1591
    %v1593 = vrot.slane %v1579, %v1592
    %v1594 = vcombine.low %v1586, %v1593
    %v1596 = vunpack.c.l.s4 1966171168
    %v1597 = vunpack.c.0.s8 %v1596
    %v1598 = vlaneseq
    %v1599 = vshrl.u32 %v1598, 7
    %v1600 = vsub.s32 %v1597, %v1599
    %v1601 = vrot.slane %v1594, %v1600
    %v1603 = vsub.f32 %v1548, %v1601
    %v1604 = vmul.f32 %v1414, %v1553
    %v1605 = vmul.f32 %v1415, %v1557
    %v1606 = vmul.f32 %v1416, %v1561
    %v1607 = vmul.f32 %v1417, %v1565
    %v1608 = vmul.f32 %v1418, %v1553
    %v1609 = vmul.f32 %v1419, %v1557
    %v1610 = vmul.f32 %v1420, %v1561
    %v1611 = vmul.f32 %v1421, %v1565
    %v1613 = vlaneseq
    %v1614 = vshrl.u32 %v1613, 7
    %v1615 = vsub.s32 0, %v1614
    %v1616 = vrot.slane %v1603, %v1615
    %v1617 = vlaneseq
    %v1618 = vshrl.u32 %v1617, 7
    %v1619 = vsub.s32 1, %v1618
    %v1620 = vrot.slane %v1603, %v1619
    %v1621 = vlaneseq
    %v1622 = vshrl.u32 %v1621, 7
    %v1623 = vsub.s32 2, %v1622
    %v1624 = vrot.slane %v1603, %v1623
    %v1625 = vlaneseq
    %v1626 = vshrl.u32 %v1625, 7
    %v1627 = vsub.s32 3, %v1626
    %v1628 = vrot.slane %v1603, %v1627
    %v1633 = vadd.f32 %v1604, %v1616
    %v1634 = vadd.f32 %v1605, %v1620
    %v1635 = vadd.f32 %v1606, %v1624
    %v1636 = vadd.f32 %v1607, %v1628
    %v1637 = vadd.f32 %v1608, %v1616
    %v1638 = vadd.f32 %v1609, %v1620
    %v1639 = vadd.f32 %v1610, %v1624
    %v1640 = vadd.f32 %v1611, %v1628
    %vm1641 = vcmp.gt.f32.partialorder %v1633, 0.0
    %vm1642 = vcmp.gt.f32.partialorder %v1634, 0.0
    %vm1643 = vcmp.gt.f32.partialorder %v1635, 0.0
    %vm1644 = vcmp.gt.f32.partialorder %v1636, 0.0
    %vm1645 = vcmp.gt.f32.partialorder %v1637, 0.0
    %vm1646 = vcmp.gt.f32.partialorder %v1638, 0.0
    %vm1647 = vcmp.gt.f32.partialorder %v1639, 0.0
    %vm1648 = vcmp.gt.f32.partialorder %v1640, 0.0
    %v1649 = vmul.f32 %v1633, 0.2
    %v1650 = vmul.f32 %v1634, 0.2
    %v1651 = vmul.f32 %v1635, 0.2
    %v1652 = vmul.f32 %v1636, 0.2
    %v1653 = vmul.f32 %v1637, 0.2
    %v1654 = vmul.f32 %v1638, 0.2
    %v1655 = vmul.f32 %v1639, 0.2
    %v1656 = vmul.f32 %v1640, 0.2
    %v1657 = vsel %vm1641, %v1633, %v1649
    %v1658 = vsel %vm1642, %v1634, %v1650
    %v1659 = vsel %vm1643, %v1635, %v1651
    %v1660 = vsel %vm1644, %v1636, %v1652
    %v1661 = vsel %vm1645, %v1637, %v1653
    %v1662 = vsel %vm1646, %v1638, %v1654
    %v1663 = vsel %vm1647, %v1639, %v1655
    %v1664 = vsel %vm1648, %v1640, %v1656
    %s1665 = smul.u32 4, 64
    %s1666 = smul.u32 %s1665, 1
    %s1667 = sshll.u32 %s1666, 4
    %1668 = dma.done %s46, %s1667
    %v1669 = vpack.c.bf16 %v1661, %v1657
    %v1670 = vpack.c.bf16 %v1662, %v1658
    %v1671 = vpack.c.bf16 %v1663, %v1659
    %v1672 = vpack.c.bf16 %v1664, %v1660
    %v1673 = vld [vmem:[#allocation3] sm:$0xff]
    %v1674 = vld [vmem:[#allocation3 + $0x8] sm:$0xff]
    %v1675 = vld [vmem:[#allocation3 + $0x10] sm:$0xff]
    %v1676 = vld [vmem:[#allocation3 + $0x18] sm:$0xff]
    %v1677 = vld [vmem:[#allocation3 + $0x20] sm:$0xff]
    %v1678 = vld [vmem:[#allocation3 + $0x28] sm:$0xff]
    %v1679 = vld [vmem:[#allocation3 + $0x30] sm:$0xff]
    %v1680 = vld [vmem:[#allocation3 + $0x38] sm:$0xff]
    %v1681 = vld [vmem:[#allocation3 + $0x40] sm:$0xff]
    %v1682 = vld [vmem:[#allocation3 + $0x48] sm:$0xff]
    %v1683 = vld [vmem:[#allocation3 + $0x50] sm:$0xff]
    %v1684 = vld [vmem:[#allocation3 + $0x58] sm:$0xff]
    %v1685 = vld [vmem:[#allocation3 + $0x60] sm:$0xff]
    %v1686 = vld [vmem:[#allocation3 + $0x68] sm:$0xff]
    %v1687 = vld [vmem:[#allocation3 + $0x70] sm:$0xff]
    %v1688 = vld [vmem:[#allocation3 + $0x78] sm:$0xff]
    %v1689 = vld [vmem:[#allocation3 + $0x80] sm:$0xff]
    %v1690 = vld [vmem:[#allocation3 + $0x88] sm:$0xff]
    %v1691 = vld [vmem:[#allocation3 + $0x90] sm:$0xff]
    %v1692 = vld [vmem:[#allocation3 + $0x98] sm:$0xff]
    %v1693 = vld [vmem:[#allocation3 + $0xa0] sm:$0xff]
    %v1694 = vld [vmem:[#allocation3 + $0xa8] sm:$0xff]
    %v1695 = vld [vmem:[#allocation3 + $0xb0] sm:$0xff]
    %v1696 = vld [vmem:[#allocation3 + $0xb8] sm:$0xff]
    %v1697 = vld [vmem:[#allocation3 + $0xc0] sm:$0xff]
    %v1698 = vld [vmem:[#allocation3 + $0xc8] sm:$0xff]
    %v1699 = vld [vmem:[#allocation3 + $0xd0] sm:$0xff]
    %v1700 = vld [vmem:[#allocation3 + $0xd8] sm:$0xff]
    %v1701 = vld [vmem:[#allocation3 + $0xe0] sm:$0xff]
    %v1702 = vld [vmem:[#allocation3 + $0xe8] sm:$0xff]
    %v1703 = vld [vmem:[#allocation3 + $0xf0] sm:$0xff]
    %v1704 = vld [vmem:[#allocation3 + $0xf8] sm:$0xff]
    %v1705 = vld [vmem:[%s2 + $0x6] ss:$0 sm:$0xff]
    %1706 = vmatprep.subr.bf16.mxu0 0
    %1707 = vmatpush1.bf16.msra.mxu0 %v1673
    %1708 = vmatprep.subr.bf16.mxu0 0
    %1709 = vmatpush1.bf16.msra.mxu0 %v1674
    %1710 = vmatprep.subr.bf16.mxu0 0
    %1711 = vmatpush1.bf16.msra.mxu0 %v1675
    %1712 = vmatprep.subr.bf16.mxu0 0
    %1713 = vmatpush1.bf16.msra.mxu0 %v1676
    %1714 = vmatprep.subr.bf16.mxu0 0
    %1715 = vmatpush1.bf16.msra.mxu0 %v1677
    %1716 = vmatprep.subr.bf16.mxu0 0
    %1717 = vmatpush1.bf16.msra.mxu0 %v1678
    %1718 = vmatprep.subr.bf16.mxu0 0
    %1719 = vmatpush1.bf16.msra.mxu0 %v1679
    %1720 = vmatprep.subr.bf16.mxu0 0
    %1721 = vmatpush1.bf16.msra.mxu0 %v1680
    %1722 = vmatprep.subr.bf16.mxu0 0
    %1723 = vmatpush1.bf16.msra.mxu0 %v1681
    %1724 = vmatprep.subr.bf16.mxu0 0
    %1725 = vmatpush1.bf16.msra.mxu0 %v1682
    %1726 = vmatprep.subr.bf16.mxu0 0
    %1727 = vmatpush1.bf16.msra.mxu0 %v1683
    %1728 = vmatprep.subr.bf16.mxu0 0
    %1729 = vmatpush1.bf16.msra.mxu0 %v1684
    %1730 = vmatprep.subr.bf16.mxu0 0
    %1731 = vmatpush1.bf16.msra.mxu0 %v1685
    %1732 = vmatprep.subr.bf16.mxu0 0
    %1733 = vmatpush1.bf16.msra.mxu0 %v1686
    %1734 = vmatprep.subr.bf16.mxu0 0
    %1735 = vmatpush1.bf16.msra.mxu0 %v1687
    %1736 = vmatprep.subr.bf16.mxu0 0
    %1737 = vmatpush1.bf16.msra.mxu0 %v1688
    %1738 = vmatprep.mubr.bf16.mxu0 %v1670
    %1739 = vmatmul.mubr.bf16.gmra.mrb[0].mxu0 %v1669
    %v1740 = vpop.f32.mrb[0].mxu0
    %v1741 = vadd.f32 %v1705, %v1740
    %v1742 = vpop.f32.mrb[0].mxu0
    %v1743 = vpop.f32.mrb[0].mxu0
    %v1744 = vadd.f32 %v1705, %v1743
    %v1745 = vpop.f32.mrb[0].mxu0
    %1746 = vdwg.mxu0
    %1747 = vmatprep.subr.bf16.mxu0 0
    %1748 = vmatpush1.bf16.msra.mxu0 %v1689
    %1749 = vmatprep.subr.bf16.mxu0 0
    %1750 = vmatpush1.bf16.msra.mxu0 %v1690
    %1751 = vmatprep.subr.bf16.mxu0 0
    %1752 = vmatpush1.bf16.msra.mxu0 %v1691
    %1753 = vmatprep.subr.bf16.mxu0 0
    %1754 = vmatpush1.bf16.msra.mxu0 %v1692
    %1755 = vmatprep.subr.bf16.mxu0 0
    %1756 = vmatpush1.bf16.msra.mxu0 %v1693
    %1757 = vmatprep.subr.bf16.mxu0 0
    %1758 = vmatpush1.bf16.msra.mxu0 %v1694
    %1759 = vmatprep.subr.bf16.mxu0 0
    %1760 = vmatpush1.bf16.msra.mxu0 %v1695
    %1761 = vmatprep.subr.bf16.mxu0 0
    %1762 = vmatpush1.bf16.msra.mxu0 %v1696
    %1763 = vmatprep.subr.bf16.mxu0 0
    %1764 = vmatpush1.bf16.msra.mxu0 %v1697
    %1765 = vmatprep.subr.bf16.mxu0 0
    %1766 = vmatpush1.bf16.msra.mxu0 %v1698
    %1767 = vmatprep.subr.bf16.mxu0 0
    %1768 = vmatpush1.bf16.msra.mxu0 %v1699
    %1769 = vmatprep.subr.bf16.mxu0 0
    %1770 = vmatpush1.bf16.msra.mxu0 %v1700
    %1771 = vmatprep.subr.bf16.mxu0 0
    %1772 = vmatpush1.bf16.msra.mxu0 %v1701
    %1773 = vmatprep.subr.bf16.mxu0 0
    %1774 = vmatpush1.bf16.msra.mxu0 %v1702
    %1775 = vmatprep.subr.bf16.mxu0 0
    %1776 = vmatpush1.bf16.msra.mxu0 %v1703
    %1777 = vmatprep.subr.bf16.mxu0 0
    %1778 = vmatpush1.bf16.msra.mxu0 %v1704
    %1779 = vmatprep.mubr.bf16.mxu0 %v1672
    %1780 = vmatmul.mubr.bf16.gmra.mrb[0].mxu0 %v1671
    %v1781 = vpop.f32.mrb[0].mxu0
    %v1782 = vadd.f32 %v1741, %v1781
    %v1783 = vpop.f32.mrb[0].mxu0
    %v1784 = vpop.f32.mrb[0].mxu0
    %v1785 = vadd.f32 %v1744, %v1784
    %v1786 = vpop.f32.mrb[0].mxu0
    %1787 = vdwg.mxu0
    %v1788 = vld [vmem:[%s5] sm:$0xff]
    %v1789 = vld [vmem:[%s5 + $0x8] sm:$0xff]
    %v1790 = vmul.f32 %v1782, 0.5
    %v1791 = vmul.f32 %v1785, 0.5
    %v1792 = vmul.f32 %v1790, 1.442695
    %v1793 = vpow.pop %v1792
    %v1794 = vmul.f32 %v1791, 1.442695
    %v1795 = vpow.pop %v1794
    %1798 = vrot.lane.b32.xlu0 %v1793, 96
    %v1799 = vpop.permute.xlu0 %1798
    %1800 = vrot.lane.b32.xlu0 %v1795, 96
    %v1801 = vpop.permute.xlu0 %1800
    %v1804 = vmul.f32 %v1788, %v1799
    %v1805 = vmul.f32 %v1789, %v1801
    %v1806 = vadd.f32 %v1782, %v1804
    %v1807 = vadd.f32 %v1785, %v1805
    %vm1808 = vcmask 261120
    %1809 = vst.msk [vmem:[#allocation8] sm:$0xff] %vm1808, %v1806
    %1810 = vst.msk [vmem:[#allocation8 + $0x8] sm:$0xff] %vm1808, %v1807
    // Predicated region
    $region60: #{tpu_custom_call.1} parent=1 // pred_check
      _
    $region61: #{tpu_custom_call.1} parent=1 // pred_check_branch
      %1812 = sbr.rel (0) target = $region63
    $region62: #{tpu_custom_call.1} parent=1 // pred_region
      %s1814 = ssub.s32 256, 256
      %1815 = vsyncadd [#allocation7], %s1814
      %s1816 = sshll.u32 [#allocation8], 4
      %s1817 = int_to_ptr.vmem [resolvable:$true] %s1816
      %1822 = dma.vmem_to_hbm [thread:$0]  %s1817, 256, %s6, [#allocation7], 128, 128, 8
    $region63: #{tpu_custom_call.1} parent=1 // pred_fallthru
      _
    // Predicated region
    $region64: #{tpu_custom_call.1} parent=1 // pred_check
      _
    $region65: #{tpu_custom_call.1} parent=1 // pred_check_branch
      %1824 = sbr.rel (0) target = $region67
    $region66: #{tpu_custom_call.1} parent=1 // pred_region
      %1825 = dma.done [#allocation7], 256
    $region67: #{tpu_custom_call.1} parent=1 // pred_fallthru
      _
    %1826 = vsyncpa [#allocation6], 1
    %1827 = vsyncpa [#allocation7], 1
  %1828 = vsyncmov [#allocation4]
  %s1829 = vpop.sfrf %1828
  %p1830 = scmp.eq.s32.totalorder %s1829, 0
  %p1831 = pneg %p1830
  %1833 = shalt.err (%p1831)
  %s1834 = scalar_lea.sflag [#allocation4], 1
  %1835 = vsyncmov %s1834
  %s1836 = vpop.sfrf %1835
  %p1837 = scmp.eq.s32.totalorder %s1836, 0
  %p1838 = pneg %p1837
  %1840 = shalt.err (%p1838)

</llo_original>
